<compile_context>
chip_gen: v7x
topology: tpu7x:2x2x1
jax: 0.10.0
libtpu: 0.0.40
codegen_flags: <defaults>
</compile_context>

<pallas_src>
import functools

import numpy as np
import jax
import jax.numpy as jnp
from jax.experimental import pallas as pl
from jax.experimental.pallas import tpu as pltpu


@functools.lru_cache(maxsize=None)
def _pool_matrix_np(W: int) -> np.ndarray:
    """(2W, W//2) operator: one flattened input row-pair -> one pooled output row.

    Exactly matches PyTorch bilinear scale_factor=0.5, align_corners=False (even W):
    every output pixel is the mean of a 2x2 input block (4 taps of 0.25).
    """
    Wq = W // 2
    d = np.zeros((2 * W, Wq), dtype=np.float32)
    q = np.arange(Wq)
    d[2 * q, q] = 0.25           # (row 2p,   col 2q)
    d[2 * q + 1, q] = 0.25       # (row 2p,   col 2q+1)
    d[W + 2 * q, q] = 0.25       # (row 2p+1, col 2q)
    d[W + 2 * q + 1, q] = 0.25   # (row 2p+1, col 2q+1)
    return d


def _choose_row_tile(Hp: int, W: int, Cin: int, itemsize: int, n_batch: int) -> int:
    """Output rows per grid step.

    Largest divisor of Hp that is sublane-legal (TR % 8 == 0 or TR == Hp) whose input
    tile stays around <= 2 MiB (roofline-sized DMA blocks, per the measured Pallas data).
    """
    tile_cap = 2 << 20
    divisors = sorted((d for d in range(1, Hp + 1) if Hp % d == 0), reverse=True)
    legal = [d for d in divisors if d == Hp or d % 8 == 0]
    fitting = [d for d in legal if Cin * d * 2 * W * itemsize <= tile_cap]
    tr = fitting[0] if fitting else legal[-1]
    # v7x has 2 TensorCores: with a single batch element keep >= 2 grid steps when that
    # does not drop the input tile below ~64 KiB.
    if n_batch == 1 and tr == Hp:
        alt = [d for d in legal if d < Hp and Cin * d * 2 * W * itemsize >= (64 << 10)]
        if alt:
            tr = alt[0]
    return tr


def _downsample_kernel(w_ref, pool_ref, x_ref, o_ref):
    # w_ref:    (Cout, Cin)        1x1 conv weight, SMEM (scalar reads)
    # pool_ref: (2W, Wq)           shared 2x2-average-pool operator, VMEM constant
    # x_ref:    (1, Cin, TR, 2W)   one batch element, TR input-row-PAIRS (NCHW order)
    # o_ref:    (1, Cout, TR, Wq)  matching NCHW output block
    cin = x_ref.shape[1]
    cout = o_ref.shape[1]
    pool = pool_ref[...]

    # Spatial 2x2 average pool on the MXU: one small (TR, 2W) @ (2W, Wq) matmul per
    # input channel with the shared de-kroned operator.
    pooled = [
        jnp.dot(x_ref[0, c], pool, preferred_element_type=jnp.float32)   # (TR, Wq)
        for c in range(cin)
    ]

    # 1x1 conv as scalar-broadcast FMAs on the VPU; K = Cin is far too small to occupy
    # the MXU and this keeps the pooled planes in their natural layout (no relayout).
    # TODO(synk): for large Cin*Cout, switch the conv back to a single MXU matmul.
    for o in range(cout):
        acc = pooled[0] * w_ref[o, 0]
        for c in range(1, cin):
            acc = acc + pooled[c] * w_ref[o, c]
        o_ref[0, o] = acc.astype(o_ref.dtype)


def downsample(x_nchw, conv_w):
    """x: (N, Cin, H, W), conv_w: (Cout, Cin, 1, 1) with Cout = Cin + s_factor.
    Returns (N, Cout, H//2, W//2) in NCHW."""
    N, Cin, H, W = x_nchw.shape
    Cout = conv_w.shape[0]
    assert conv_w.shape == (Cout, Cin, 1, 1)
    assert H % 2 == 0 and W % 2 == 0, "bilinear 0.5x kernel assumes even H, W"
    Hp, Wq = H // 2, W // 2

    itemsize = jnp.dtype(x_nchw.dtype).itemsize
    TR = _choose_row_tile(Hp, W, Cin, itemsize, N)     # output rows per grid step
    n_tiles = Hp // TR

    pool_mat = jnp.asarray(_pool_matrix_np(W), dtype=x_nchw.dtype)   # (2W, Wq)
    w_mat = conv_w[:, :, 0, 0].astype(jnp.float32)                   # (Cout, Cin)

    # Free reshape: (N, Cin, H, W) -> (N, Cin, Hp, 2W); each "row" is one row-pair.
    x_pairs = x_nchw.reshape(N, Cin, Hp, 2 * W)

    # VMEM actually needed: double-buffered x/out blocks + the (tiny) constants.
    x_blk = Cin * TR * 2 * W * itemsize
    o_blk = Cout * TR * Wq * itemsize
    pool_blk = 2 * W * Wq * itemsize
    vmem_limit = int(min(max(2 * (x_blk + o_blk + pool_blk) + (2 << 20), 16 << 20),
                         48 << 20))

    out = pl.pallas_call(
        _downsample_kernel,
        out_shape=jax.ShapeDtypeStruct((N, Cout, Hp, Wq), x_nchw.dtype),
        grid_spec=pltpu.PrefetchScalarGridSpec(
            num_scalar_prefetch=0,
            grid=(N, n_tiles),
            in_specs=[
                pl.BlockSpec(memory_space=pltpu.MemorySpace.SMEM),              # conv w
                pl.BlockSpec((2 * W, Wq), lambda n, t: (0, 0)),                 # pool op
                pl.BlockSpec((1, Cin, TR, 2 * W), lambda n, t: (n, 0, t, 0)),   # x tile
            ],
            out_specs=pl.BlockSpec((1, Cout, TR, Wq), lambda n, t: (n, 0, t, 0)),
        ),
        compiler_params=pltpu.CompilerParams(
            dimension_semantics=("parallel", "parallel"),
            vmem_limit_bytes=vmem_limit,
        ),
    )(w_mat, pool_mat, x_pairs)

    return out                                           # already (N, Cout, Hp, Wq)


def _reference(x, conv_w):
    # Independent pure-JAX reference: PyTorch bilinear 0.5x (align_corners=False) on
    # even dims is exactly 2x2 average pooling; then a 1x1 conv with no bias.
    N, Cin, H, W = x.shape
    pooled = x.reshape(N, Cin, H // 2, 2, W // 2, 2).mean(axis=(3, 5))
    return jnp.einsum("nchw,oc->nohw", pooled, conv_w[:, :, 0, 0],
                      precision=jax.lax.Precision.HIGHEST)


if __name__ == "__main__":
    jax.config.update("jax_default_matmul_precision", "highest")

    in_channels, s_factor = 4, 4                 # DownSample(in_channels=4, s_factor=4)
    N, H, W = 2, 16, 16
    Cin, Cout = in_channels, in_channels + s_factor

    key = jax.random.PRNGKey(0)
    kx, kw = jax.random.split(key)
    x = jax.random.normal(kx, (N, Cin, H, W), dtype=jnp.float32)           # (2, 4, 16, 16)
    conv_w = jax.random.normal(kw, (Cout, Cin, 1, 1), dtype=jnp.float32) * 0.1

    out = jax.block_until_ready(downsample(x, conv_w))
    assert out.shape == (N, Cout, H // 2, W // 2)

    ref = _reference(x, conv_w)
    np.testing.assert_allclose(np.asarray(out), np.asarray(ref), rtol=2e-3, atol=2e-3)
    print("KERNEL_OK")
</pallas_src>

<mosaic_0001>
module attributes {stable_mosaic.version = 11 : i64} {
  func.func @_downsample_kernel(%arg0: i32, %arg1: i32, %arg2: memref<8x4xf32, #tpu.memory_space<smem>>, %arg3: memref<32x8xf32, #tpu.memory_space<vmem>>, %arg4: memref<1x4x8x32xf32, #tpu.memory_space<vmem>>, %arg5: memref<1x8x8x8xf32, #tpu.memory_space<vmem>>) attributes {dimension_semantics = [#tpu.dimension_semantics<parallel>, #tpu.dimension_semantics<parallel>], iteration_bounds = array<i64: 2, 1>, scalar_prefetch = 0 : i64, scratch_operands = 0 : i64, tpu.core_type = #tpu.core_type<tc>, window_params = [{transform_indices = @transform_0, window_bounds = array<i64: 8, 4>}, {pipeline_mode = #tpu.pipeline_mode<synchronous>, transform_indices = @transform_1, window_bounds = array<i64: 32, 8>}, {transform_indices = @transform_2, window_bounds = array<i64: 1, 4, 8, 32>}, {transform_indices = @transform_3, window_bounds = array<i64: 1, 8, 8, 8>}]} {
    %c0 = arith.constant 0 : index
    %c0_0 = arith.constant 0 : index
    %0 = vector.load %arg3[%c0, %c0_0] : memref<32x8xf32, #tpu.memory_space<vmem>>, vector<32x8xf32>
    %c0_1 = arith.constant 0 : index
    %c0_2 = arith.constant 0 : index
    %c0_3 = arith.constant 0 : index
    %c0_4 = arith.constant 0 : index
    %1 = vector.load %arg4[%c0_1, %c0_2, %c0_3, %c0_4] : memref<1x4x8x32xf32, #tpu.memory_space<vmem>>, vector<1x1x8x32xf32>
    %2 = vector.shape_cast %1 : vector<1x1x8x32xf32> to vector<8x32xf32>
    %cst = arith.constant dense<0.000000e+00> : vector<8x8xf32>
    %3 = tpu.matmul %2, %0, %cst {dimension_numbers = #tpu.dot_dimension_numbers<[1], [0], [0], [1], [0, 0, 1, 1], [], []>, precision = #tpu.contract_precision<fp32>} : vector<8x32xf32>, vector<32x8xf32>, vector<8x8xf32> -> vector<8x8xf32>
    %c0_5 = arith.constant 0 : index
    %c1 = arith.constant 1 : index
    %c0_6 = arith.constant 0 : index
    %c0_7 = arith.constant 0 : index
    %4 = vector.load %arg4[%c0_5, %c1, %c0_6, %c0_7] : memref<1x4x8x32xf32, #tpu.memory_space<vmem>>, vector<1x1x8x32xf32>
    %5 = vector.shape_cast %4 : vector<1x1x8x32xf32> to vector<8x32xf32>
    %cst_8 = arith.constant dense<0.000000e+00> : vector<8x8xf32>
    %6 = tpu.matmul %5, %0, %cst_8 {dimension_numbers = #tpu.dot_dimension_numbers<[1], [0], [0], [1], [0, 0, 1, 1], [], []>, precision = #tpu.contract_precision<fp32>} : vector<8x32xf32>, vector<32x8xf32>, vector<8x8xf32> -> vector<8x8xf32>
    %c0_9 = arith.constant 0 : index
    %c2 = arith.constant 2 : index
    %c0_10 = arith.constant 0 : index
    %c0_11 = arith.constant 0 : index
    %7 = vector.load %arg4[%c0_9, %c2, %c0_10, %c0_11] : memref<1x4x8x32xf32, #tpu.memory_space<vmem>>, vector<1x1x8x32xf32>
    %8 = vector.shape_cast %7 : vector<1x1x8x32xf32> to vector<8x32xf32>
    %cst_12 = arith.constant dense<0.000000e+00> : vector<8x8xf32>
    %9 = tpu.matmul %8, %0, %cst_12 {dimension_numbers = #tpu.dot_dimension_numbers<[1], [0], [0], [1], [0, 0, 1, 1], [], []>, precision = #tpu.contract_precision<fp32>} : vector<8x32xf32>, vector<32x8xf32>, vector<8x8xf32> -> vector<8x8xf32>
    %c0_13 = arith.constant 0 : index
    %c3 = arith.constant 3 : index
    %c0_14 = arith.constant 0 : index
    %c0_15 = arith.constant 0 : index
    %10 = vector.load %arg4[%c0_13, %c3, %c0_14, %c0_15] : memref<1x4x8x32xf32, #tpu.memory_space<vmem>>, vector<1x1x8x32xf32>
    %11 = vector.shape_cast %10 : vector<1x1x8x32xf32> to vector<8x32xf32>
    %cst_16 = arith.constant dense<0.000000e+00> : vector<8x8xf32>
    %12 = tpu.matmul %11, %0, %cst_16 {dimension_numbers = #tpu.dot_dimension_numbers<[1], [0], [0], [1], [0, 0, 1, 1], [], []>, precision = #tpu.contract_precision<fp32>} : vector<8x32xf32>, vector<32x8xf32>, vector<8x8xf32> -> vector<8x8xf32>
    %c0_17 = arith.constant 0 : index
    %c0_18 = arith.constant 0 : index
    %13 = memref.load %arg2[%c0_17, %c0_18] : memref<8x4xf32, #tpu.memory_space<smem>>
    %14 = vector.broadcast %13 : f32 to vector<8x8xf32>
    %15 = arith.mulf %3, %14 : vector<8x8xf32>
    %c0_19 = arith.constant 0 : index
    %c1_20 = arith.constant 1 : index
    %16 = memref.load %arg2[%c0_19, %c1_20] : memref<8x4xf32, #tpu.memory_space<smem>>
    %17 = vector.broadcast %16 : f32 to vector<8x8xf32>
    %18 = arith.mulf %6, %17 : vector<8x8xf32>
    %19 = arith.addf %15, %18 : vector<8x8xf32>
    %c0_21 = arith.constant 0 : index
    %c2_22 = arith.constant 2 : index
    %20 = memref.load %arg2[%c0_21, %c2_22] : memref<8x4xf32, #tpu.memory_space<smem>>
    %21 = vector.broadcast %20 : f32 to vector<8x8xf32>
    %22 = arith.mulf %9, %21 : vector<8x8xf32>
    %23 = arith.addf %19, %22 : vector<8x8xf32>
    %c0_23 = arith.constant 0 : index
    %c3_24 = arith.constant 3 : index
    %24 = memref.load %arg2[%c0_23, %c3_24] : memref<8x4xf32, #tpu.memory_space<smem>>
    %25 = vector.broadcast %24 : f32 to vector<8x8xf32>
    %26 = arith.mulf %12, %25 : vector<8x8xf32>
    %27 = arith.addf %23, %26 : vector<8x8xf32>
    %c0_25 = arith.constant 0 : index
    %c0_26 = arith.constant 0 : index
    %c0_27 = arith.constant 0 : index
    %c0_28 = arith.constant 0 : index
    %28 = vector.load %arg5[%c0_25, %c0_26, %c0_27, %c0_28] : memref<1x8x8x8xf32, #tpu.memory_space<vmem>>, vector<1x1x8x8xf32>
    %29 = vector.shape_cast %28 : vector<1x1x8x8xf32> to vector<8x8xf32>
    %30 = vector.shape_cast %27 : vector<8x8xf32> to vector<1x1x8x8xf32>
    tpu.vector_store %arg5[%c0_25, %c0_26, %c0_27, %c0_28], %30 {strides = array<i32>} : memref<1x8x8x8xf32, #tpu.memory_space<vmem>>, vector<1x1x8x8xf32>,
    %c1_29 = arith.constant 1 : index
    %c0_30 = arith.constant 0 : index
    %31 = memref.load %arg2[%c1_29, %c0_30] : memref<8x4xf32, #tpu.memory_space<smem>>
    %32 = vector.broadcast %31 : f32 to vector<8x8xf32>
    %33 = arith.mulf %3, %32 : vector<8x8xf32>
    %c1_31 = arith.constant 1 : index
    %c1_32 = arith.constant 1 : index
    %34 = memref.load %arg2[%c1_31, %c1_32] : memref<8x4xf32, #tpu.memory_space<smem>>
    %35 = vector.broadcast %34 : f32 to vector<8x8xf32>
    %36 = arith.mulf %6, %35 : vector<8x8xf32>
    %37 = arith.addf %33, %36 : vector<8x8xf32>
    %c1_33 = arith.constant 1 : index
    %c2_34 = arith.constant 2 : index
    %38 = memref.load %arg2[%c1_33, %c2_34] : memref<8x4xf32, #tpu.memory_space<smem>>
    %39 = vector.broadcast %38 : f32 to vector<8x8xf32>
    %40 = arith.mulf %9, %39 : vector<8x8xf32>
    %41 = arith.addf %37, %40 : vector<8x8xf32>
    %c1_35 = arith.constant 1 : index
    %c3_36 = arith.constant 3 : index
    %42 = memref.load %arg2[%c1_35, %c3_36] : memref<8x4xf32, #tpu.memory_space<smem>>
    %43 = vector.broadcast %42 : f32 to vector<8x8xf32>
    %44 = arith.mulf %12, %43 : vector<8x8xf32>
    %45 = arith.addf %41, %44 : vector<8x8xf32>
    %c0_37 = arith.constant 0 : index
    %c1_38 = arith.constant 1 : index
    %c0_39 = arith.constant 0 : index
    %c0_40 = arith.constant 0 : index
    %46 = vector.load %arg5[%c0_37, %c1_38, %c0_39, %c0_40] : memref<1x8x8x8xf32, #tpu.memory_space<vmem>>, vector<1x1x8x8xf32>
    %47 = vector.shape_cast %46 : vector<1x1x8x8xf32> to vector<8x8xf32>
    %48 = vector.shape_cast %45 : vector<8x8xf32> to vector<1x1x8x8xf32>
    tpu.vector_store %arg5[%c0_37, %c1_38, %c0_39, %c0_40], %48 {strides = array<i32>} : memref<1x8x8x8xf32, #tpu.memory_space<vmem>>, vector<1x1x8x8xf32>,
    %c2_41 = arith.constant 2 : index
    %c0_42 = arith.constant 0 : index
    %49 = memref.load %arg2[%c2_41, %c0_42] : memref<8x4xf32, #tpu.memory_space<smem>>
    %50 = vector.broadcast %49 : f32 to vector<8x8xf32>
    %51 = arith.mulf %3, %50 : vector<8x8xf32>
    %c2_43 = arith.constant 2 : index
    %c1_44 = arith.constant 1 : index
    %52 = memref.load %arg2[%c2_43, %c1_44] : memref<8x4xf32, #tpu.memory_space<smem>>
    %53 = vector.broadcast %52 : f32 to vector<8x8xf32>
    %54 = arith.mulf %6, %53 : vector<8x8xf32>
    %55 = arith.addf %51, %54 : vector<8x8xf32>
    %c2_45 = arith.constant 2 : index
    %c2_46 = arith.constant 2 : index
    %56 = memref.load %arg2[%c2_45, %c2_46] : memref<8x4xf32, #tpu.memory_space<smem>>
    %57 = vector.broadcast %56 : f32 to vector<8x8xf32>
    %58 = arith.mulf %9, %57 : vector<8x8xf32>
    %59 = arith.addf %55, %58 : vector<8x8xf32>
    %c2_47 = arith.constant 2 : index
    %c3_48 = arith.constant 3 : index
    %60 = memref.load %arg2[%c2_47, %c3_48] : memref<8x4xf32, #tpu.memory_space<smem>>
    %61 = vector.broadcast %60 : f32 to vector<8x8xf32>
    %62 = arith.mulf %12, %61 : vector<8x8xf32>
    %63 = arith.addf %59, %62 : vector<8x8xf32>
    %c0_49 = arith.constant 0 : index
    %c2_50 = arith.constant 2 : index
    %c0_51 = arith.constant 0 : index
    %c0_52 = arith.constant 0 : index
    %64 = vector.load %arg5[%c0_49, %c2_50, %c0_51, %c0_52] : memref<1x8x8x8xf32, #tpu.memory_space<vmem>>, vector<1x1x8x8xf32>
    %65 = vector.shape_cast %64 : vector<1x1x8x8xf32> to vector<8x8xf32>
    %66 = vector.shape_cast %63 : vector<8x8xf32> to vector<1x1x8x8xf32>
    tpu.vector_store %arg5[%c0_49, %c2_50, %c0_51, %c0_52], %66 {strides = array<i32>} : memref<1x8x8x8xf32, #tpu.memory_space<vmem>>, vector<1x1x8x8xf32>,
    %c3_53 = arith.constant 3 : index
    %c0_54 = arith.constant 0 : index
    %67 = memref.load %arg2[%c3_53, %c0_54] : memref<8x4xf32, #tpu.memory_space<smem>>
    %68 = vector.broadcast %67 : f32 to vector<8x8xf32>
    %69 = arith.mulf %3, %68 : vector<8x8xf32>
    %c3_55 = arith.constant 3 : index
    %c1_56 = arith.constant 1 : index
    %70 = memref.load %arg2[%c3_55, %c1_56] : memref<8x4xf32, #tpu.memory_space<smem>>
    %71 = vector.broadcast %70 : f32 to vector<8x8xf32>
    %72 = arith.mulf %6, %71 : vector<8x8xf32>
    %73 = arith.addf %69, %72 : vector<8x8xf32>
    %c3_57 = arith.constant 3 : index
    %c2_58 = arith.constant 2 : index
    %74 = memref.load %arg2[%c3_57, %c2_58] : memref<8x4xf32, #tpu.memory_space<smem>>
    %75 = vector.broadcast %74 : f32 to vector<8x8xf32>
    %76 = arith.mulf %9, %75 : vector<8x8xf32>
    %77 = arith.addf %73, %76 : vector<8x8xf32>
    %c3_59 = arith.constant 3 : index
    %c3_60 = arith.constant 3 : index
    %78 = memref.load %arg2[%c3_59, %c3_60] : memref<8x4xf32, #tpu.memory_space<smem>>
    %79 = vector.broadcast %78 : f32 to vector<8x8xf32>
    %80 = arith.mulf %12, %79 : vector<8x8xf32>
    %81 = arith.addf %77, %80 : vector<8x8xf32>
    %c0_61 = arith.constant 0 : index
    %c3_62 = arith.constant 3 : index
    %c0_63 = arith.constant 0 : index
    %c0_64 = arith.constant 0 : index
    %82 = vector.load %arg5[%c0_61, %c3_62, %c0_63, %c0_64] : memref<1x8x8x8xf32, #tpu.memory_space<vmem>>, vector<1x1x8x8xf32>
    %83 = vector.shape_cast %82 : vector<1x1x8x8xf32> to vector<8x8xf32>
    %84 = vector.shape_cast %81 : vector<8x8xf32> to vector<1x1x8x8xf32>
    tpu.vector_store %arg5[%c0_61, %c3_62, %c0_63, %c0_64], %84 {strides = array<i32>} : memref<1x8x8x8xf32, #tpu.memory_space<vmem>>, vector<1x1x8x8xf32>,
    %c4 = arith.constant 4 : index
    %c0_65 = arith.constant 0 : index
    %85 = memref.load %arg2[%c4, %c0_65] : memref<8x4xf32, #tpu.memory_space<smem>>
    %86 = vector.broadcast %85 : f32 to vector<8x8xf32>
    %87 = arith.mulf %3, %86 : vector<8x8xf32>
    %c4_66 = arith.constant 4 : index
    %c1_67 = arith.constant 1 : index
    %88 = memref.load %arg2[%c4_66, %c1_67] : memref<8x4xf32, #tpu.memory_space<smem>>
    %89 = vector.broadcast %88 : f32 to vector<8x8xf32>
    %90 = arith.mulf %6, %89 : vector<8x8xf32>
    %91 = arith.addf %87, %90 : vector<8x8xf32>
    %c4_68 = arith.constant 4 : index
    %c2_69 = arith.constant 2 : index
    %92 = memref.load %arg2[%c4_68, %c2_69] : memref<8x4xf32, #tpu.memory_space<smem>>
    %93 = vector.broadcast %92 : f32 to vector<8x8xf32>
    %94 = arith.mulf %9, %93 : vector<8x8xf32>
    %95 = arith.addf %91, %94 : vector<8x8xf32>
    %c4_70 = arith.constant 4 : index
    %c3_71 = arith.constant 3 : index
    %96 = memref.load %arg2[%c4_70, %c3_71] : memref<8x4xf32, #tpu.memory_space<smem>>
    %97 = vector.broadcast %96 : f32 to vector<8x8xf32>
    %98 = arith.mulf %12, %97 : vector<8x8xf32>
    %99 = arith.addf %95, %98 : vector<8x8xf32>
    %c0_72 = arith.constant 0 : index
    %c4_73 = arith.constant 4 : index
    %c0_74 = arith.constant 0 : index
    %c0_75 = arith.constant 0 : index
    %100 = vector.load %arg5[%c0_72, %c4_73, %c0_74, %c0_75] : memref<1x8x8x8xf32, #tpu.memory_space<vmem>>, vector<1x1x8x8xf32>
    %101 = vector.shape_cast %100 : vector<1x1x8x8xf32> to vector<8x8xf32>
    %102 = vector.shape_cast %99 : vector<8x8xf32> to vector<1x1x8x8xf32>
    tpu.vector_store %arg5[%c0_72, %c4_73, %c0_74, %c0_75], %102 {strides = array<i32>} : memref<1x8x8x8xf32, #tpu.memory_space<vmem>>, vector<1x1x8x8xf32>,
    %c5 = arith.constant 5 : index
    %c0_76 = arith.constant 0 : index
    %103 = memref.load %arg2[%c5, %c0_76] : memref<8x4xf32, #tpu.memory_space<smem>>
    %104 = vector.broadcast %103 : f32 to vector<8x8xf32>
    %105 = arith.mulf %3, %104 : vector<8x8xf32>
    %c5_77 = arith.constant 5 : index
    %c1_78 = arith.constant 1 : index
    %106 = memref.load %arg2[%c5_77, %c1_78] : memref<8x4xf32, #tpu.memory_space<smem>>
    %107 = vector.broadcast %106 : f32 to vector<8x8xf32>
    %108 = arith.mulf %6, %107 : vector<8x8xf32>
    %109 = arith.addf %105, %108 : vector<8x8xf32>
    %c5_79 = arith.constant 5 : index
    %c2_80 = arith.constant 2 : index
    %110 = memref.load %arg2[%c5_79, %c2_80] : memref<8x4xf32, #tpu.memory_space<smem>>
    %111 = vector.broadcast %110 : f32 to vector<8x8xf32>
    %112 = arith.mulf %9, %111 : vector<8x8xf32>
    %113 = arith.addf %109, %112 : vector<8x8xf32>
    %c5_81 = arith.constant 5 : index
    %c3_82 = arith.constant 3 : index
    %114 = memref.load %arg2[%c5_81, %c3_82] : memref<8x4xf32, #tpu.memory_space<smem>>
    %115 = vector.broadcast %114 : f32 to vector<8x8xf32>
    %116 = arith.mulf %12, %115 : vector<8x8xf32>
    %117 = arith.addf %113, %116 : vector<8x8xf32>
    %c0_83 = arith.constant 0 : index
    %c5_84 = arith.constant 5 : index
    %c0_85 = arith.constant 0 : index
    %c0_86 = arith.constant 0 : index
    %118 = vector.load %arg5[%c0_83, %c5_84, %c0_85, %c0_86] : memref<1x8x8x8xf32, #tpu.memory_space<vmem>>, vector<1x1x8x8xf32>
    %119 = vector.shape_cast %118 : vector<1x1x8x8xf32> to vector<8x8xf32>
    %120 = vector.shape_cast %117 : vector<8x8xf32> to vector<1x1x8x8xf32>
    tpu.vector_store %arg5[%c0_83, %c5_84, %c0_85, %c0_86], %120 {strides = array<i32>} : memref<1x8x8x8xf32, #tpu.memory_space<vmem>>, vector<1x1x8x8xf32>,
    %c6 = arith.constant 6 : index
    %c0_87 = arith.constant 0 : index
    %121 = memref.load %arg2[%c6, %c0_87] : memref<8x4xf32, #tpu.memory_space<smem>>
    %122 = vector.broadcast %121 : f32 to vector<8x8xf32>
    %123 = arith.mulf %3, %122 : vector<8x8xf32>
    %c6_88 = arith.constant 6 : index
    %c1_89 = arith.constant 1 : index
    %124 = memref.load %arg2[%c6_88, %c1_89] : memref<8x4xf32, #tpu.memory_space<smem>>
    %125 = vector.broadcast %124 : f32 to vector<8x8xf32>
    %126 = arith.mulf %6, %125 : vector<8x8xf32>
    %127 = arith.addf %123, %126 : vector<8x8xf32>
    %c6_90 = arith.constant 6 : index
    %c2_91 = arith.constant 2 : index
    %128 = memref.load %arg2[%c6_90, %c2_91] : memref<8x4xf32, #tpu.memory_space<smem>>
    %129 = vector.broadcast %128 : f32 to vector<8x8xf32>
    %130 = arith.mulf %9, %129 : vector<8x8xf32>
    %131 = arith.addf %127, %130 : vector<8x8xf32>
    %c6_92 = arith.constant 6 : index
    %c3_93 = arith.constant 3 : index
    %132 = memref.load %arg2[%c6_92, %c3_93] : memref<8x4xf32, #tpu.memory_space<smem>>
    %133 = vector.broadcast %132 : f32 to vector<8x8xf32>
    %134 = arith.mulf %12, %133 : vector<8x8xf32>
    %135 = arith.addf %131, %134 : vector<8x8xf32>
    %c0_94 = arith.constant 0 : index
    %c6_95 = arith.constant 6 : index
    %c0_96 = arith.constant 0 : index
    %c0_97 = arith.constant 0 : index
    %136 = vector.load %arg5[%c0_94, %c6_95, %c0_96, %c0_97] : memref<1x8x8x8xf32, #tpu.memory_space<vmem>>, vector<1x1x8x8xf32>
    %137 = vector.shape_cast %136 : vector<1x1x8x8xf32> to vector<8x8xf32>
    %138 = vector.shape_cast %135 : vector<8x8xf32> to vector<1x1x8x8xf32>
    tpu.vector_store %arg5[%c0_94, %c6_95, %c0_96, %c0_97], %138 {strides = array<i32>} : memref<1x8x8x8xf32, #tpu.memory_space<vmem>>, vector<1x1x8x8xf32>,
    %c7 = arith.constant 7 : index
    %c0_98 = arith.constant 0 : index
    %139 = memref.load %arg2[%c7, %c0_98] : memref<8x4xf32, #tpu.memory_space<smem>>
    %140 = vector.broadcast %139 : f32 to vector<8x8xf32>
    %141 = arith.mulf %3, %140 : vector<8x8xf32>
    %c7_99 = arith.constant 7 : index
    %c1_100 = arith.constant 1 : index
    %142 = memref.load %arg2[%c7_99, %c1_100] : memref<8x4xf32, #tpu.memory_space<smem>>
    %143 = vector.broadcast %142 : f32 to vector<8x8xf32>
    %144 = arith.mulf %6, %143 : vector<8x8xf32>
    %145 = arith.addf %141, %144 : vector<8x8xf32>
    %c7_101 = arith.constant 7 : index
    %c2_102 = arith.constant 2 : index
    %146 = memref.load %arg2[%c7_101, %c2_102] : memref<8x4xf32, #tpu.memory_space<smem>>
    %147 = vector.broadcast %146 : f32 to vector<8x8xf32>
    %148 = arith.mulf %9, %147 : vector<8x8xf32>
    %149 = arith.addf %145, %148 : vector<8x8xf32>
    %c7_103 = arith.constant 7 : index
    %c3_104 = arith.constant 3 : index
    %150 = memref.load %arg2[%c7_103, %c3_104] : memref<8x4xf32, #tpu.memory_space<smem>>
    %151 = vector.broadcast %150 : f32 to vector<8x8xf32>
    %152 = arith.mulf %12, %151 : vector<8x8xf32>
    %153 = arith.addf %149, %152 : vector<8x8xf32>
    %c0_105 = arith.constant 0 : index
    %c7_106 = arith.constant 7 : index
    %c0_107 = arith.constant 0 : index
    %c0_108 = arith.constant 0 : index
    %154 = vector.load %arg5[%c0_105, %c7_106, %c0_107, %c0_108] : memref<1x8x8x8xf32, #tpu.memory_space<vmem>>, vector<1x1x8x8xf32>
    %155 = vector.shape_cast %154 : vector<1x1x8x8xf32> to vector<8x8xf32>
    %156 = vector.shape_cast %153 : vector<8x8xf32> to vector<1x1x8x8xf32>
    tpu.vector_store %arg5[%c0_105, %c7_106, %c0_107, %c0_108], %156 {strides = array<i32>} : memref<1x8x8x8xf32, #tpu.memory_space<vmem>>, vector<1x1x8x8xf32>,
    return
  }
  func.func @transform_0(%arg0: i32, %arg1: i32) -> (i32, i32) {
    %c0_i32 = arith.constant 0 : i32
    %c0_i32_0 = arith.constant 0 : i32
    %c0_i32_1 = arith.constant 0 : i32
    return %c0_i32, %c0_i32_0 : i32, i32
  }
  func.func @transform_1(%arg0: i32, %arg1: i32) -> (i32, i32) {
    %c0_i32 = arith.constant 0 : i32
    %c0_i32_0 = arith.constant 0 : i32
    %c0_i32_1 = arith.constant 0 : i32
    return %c0_i32, %c0_i32_0 : i32, i32
  }
  func.func @transform_2(%arg0: i32, %arg1: i32) -> (i32, i32, i32, i32) {
    %c0_i32 = arith.constant 0 : i32
    %c0_i32_0 = arith.constant 0 : i32
    %c0_i32_1 = arith.constant 0 : i32
    return %arg0, %c0_i32, %arg1, %c0_i32_0 : i32, i32, i32, i32
  }
  func.func @transform_3(%arg0: i32, %arg1: i32) -> (i32, i32, i32, i32) {
    %c0_i32 = arith.constant 0 : i32
    %c0_i32_0 = arith.constant 0 : i32
    %c0_i32_1 = arith.constant 0 : i32
    return %arg0, %c0_i32, %arg1, %c0_i32_0 : i32, i32, i32, i32
  }
}

</mosaic_0001>

<llo_original>
// kernel: tpu_custom_call.1
$region0: #{tpu_custom_call.1}
  #allocation0 [shape = 'u32[]', space=smem, size = 0x4, offset = 0x4, fixed_abs, tag = 'smem constant byte address 0x4 - core index']
  #allocation1 [shape = 'u32[144,128]{1,0:T(1,128)}', space=vmem, size = 0x12000, scoped, tag = 'internal scratch']
  %s0 = inlined_call_operand.vmem [shape: f32[8,4], index: 0, kind: input, shape index: {}]
  %s1 = inlined_call_operand.vmem [shape: f32[32,8], index: 1, kind: input, shape index: {}]
  %s2 = inlined_call_operand.hbm [shape: f32[2,4,8,32], index: 2, kind: input, shape index: {}]
  %s3 = inlined_call_operand.hbm [shape: f32[2,8,8,8], index: 3, kind: output, shape index: {}]
  %s4 = sld [smem:[#allocation0]]
  $region53: #{tpu_custom_call.1} parent=0
    _
  %s6 = ssub.s32 1, %s4
  %s7 = scalar_select 0, %s6, %s4
  $region1: #{tpu_custom_call.1} parent=0
    #allocation2 [shape = 'u8[4096]{0}', space=smem, size = 0x1000, scoped, tag = 'input window, operand 0, single buffered']
    #allocation3 [shape = 's32[2]{0}', space=sflag, size = 0x8, scoped, tag = 'scoped memory for tpu_custom_call.1']
    #allocation4 [shape = 's32[2]{0}', space=sflag, size = 0x8, scoped, tag = 'scoped memory for tpu_custom_call.1']
    #allocation5 [shape = 's32[2]{0}', space=sflag, size = 0x8, scoped, tag = 'scoped memory for tpu_custom_call.1']
    #allocation6 [shape = 'u8[32768]{0}', space=vmem, size = 0x8000, scoped, tag = 'input window, operand 2']
    #allocation7 [shape = 'u8[65536]{0}', space=vmem, size = 0x10000, scoped, tag = 'output window, operand 0']
    %8 = vsyncpa [#allocation5], 0
    %9 = vsyncpa [#allocation3], 0
    %s10 = scalar_lea.sflag [#allocation3], 1
    %11 = vsyncpa %s10, 0
    %12 = vsyncpa [#allocation4], 0
    %s13 = scalar_lea.sflag [#allocation4], 1
    %14 = vsyncpa %s13, 0
    loop: start=0, step=1, limit=4
    $region2: #{tpu_custom_call.1} parent=1 // loop_pre_header
      _
    $region3: #{tpu_custom_call.1} parent=1 // loop_header
      %s16 = sphi 0, %s20
      %p17 = scmp.ge.s32.totalorder %s16, 4
      %s23 = sphi 0, %s35
      %s24 = sphi 0, %s31
      %s25 = sphi 0, %s23
      %s26 = sphi 0, %s24
      %s27 = sphi 0, %s25
      %s28 = sphi 0, %s26
      %s36 = sphi 0, %s36
      %s38 = sphi 0, %s36
      %s39 = sphi 0, %s38
      %s53 = sphi 0, %s39
      %s57 = sphi 0, %s57
      %s59 = sphi 0, %s57
      %s60 = sphi 0, %s59
      %s74 = sphi 0, %s60
      %s82 = sphi 0, %s84
      %s85 = sphi 0, %s82
      %s86 = sphi 0, %s85
      %s102 = sphi 0, %s86
      %s110 = sphi 0, %s112
      %s113 = sphi 0, %s110
      %s114 = sphi 0, %s113
      %s130 = sphi 0, %s114
    $region4: #{tpu_custom_call.1} parent=1 // loop_header_branch
      %19 = sbr.rel (%p17) target = $region8
    $region5: #{tpu_custom_call.1} parent=1 // loop_body
      %s21 = ssub.s32 %s16, 1
      %s22 = ssub.s32 %s16, 2
      %s29 = sadd.s32 1, %s24
      %p30 = scmp.ge.s32.totalorder %s29, 1
      %s31 = scalar_select %p30, 0, %s29
      %s32 = sadd.s32 1, %s23
      %s33 = scalar_select %p30, %s32, %s23
      %p34 = scmp.ge.s32.totalorder %s33, 2
      %s35 = scalar_select %p34, 0, %s33
      %s37 = sadd.s32 %s36, 1
      %p40 = scmp.eq.s32.totalorder %s16, 1
      %p41 = scmp.ne.s32.totalorder %s36, %s38
      %p42 = scmp.eq.s32.totalorder %s16, 0
      %p43 = por %p41, %p42
      %p44 = scmp.ne.s32.totalorder %s36, %s38
      %p45 = scmp.eq.s32.totalorder %s21, 1
      %p46 = por %p44, %p45
      %p47 = scmp.ne.s32.totalorder %s38, %s39
      %p48 = scmp.eq.s32.totalorder %s21, 0
      %p49 = por %p47, %p48
      %p50 = scmp.ne.s32.totalorder %s38, %s39
      %p51 = scmp.eq.s32.totalorder %s22, 1
      %p52 = por %p50, %p51
      %p54 = scmp.ne.s32.totalorder %s39, %s53
      %p55 = scmp.eq.s32.totalorder %s22, 0
      %p56 = por %p54, %p55
      %s58 = sadd.s32 %s57, 1
      %p61 = scmp.eq.s32.totalorder %s16, 1
      %p62 = scmp.ne.s32.totalorder %s57, %s59
      %p63 = scmp.eq.s32.totalorder %s16, 0
      %p64 = por %p62, %p63
      %p65 = scmp.ne.s32.totalorder %s57, %s59
      %p66 = scmp.eq.s32.totalorder %s21, 1
      %p67 = por %p65, %p66
      %p68 = scmp.ne.s32.totalorder %s59, %s60
      %p69 = scmp.eq.s32.totalorder %s21, 0
      %p70 = por %p68, %p69
      %p71 = scmp.ne.s32.totalorder %s59, %s60
      %p72 = scmp.eq.s32.totalorder %s22, 1
      %p73 = por %p71, %p72
      %p75 = scmp.ne.s32.totalorder %s60, %s74
      %p76 = scmp.eq.s32.totalorder %s22, 0
      %p77 = por %p75, %p76
      %s78 = ssub.s32 %s23, %s35
      %s79 = ssub.s32 %s24, %s31
      %s80 = sor.u32 %s78, %s79
      %p81 = scmp.eq.s32.totalorder %s80, 0
      %s83 = sadd.s32 %s82, 1
      %s84 = scalar_select %p81, %s82, %s83
      %p87 = pneg %p81
      %p88 = scmp.eq.s32.totalorder %s16, 1
      %p89 = por %p87, %p88
      %p90 = scmp.ne.s32.totalorder %s82, %s85
      %p91 = scmp.eq.s32.totalorder %s16, 0
      %p92 = por %p90, %p91
      %p93 = scmp.ne.s32.totalorder %s82, %s85
      %p94 = scmp.eq.s32.totalorder %s21, 1
      %p95 = por %p93, %p94
      %p96 = scmp.ne.s32.totalorder %s85, %s86
      %p97 = scmp.eq.s32.totalorder %s21, 0
      %p98 = por %p96, %p97
      %p99 = scmp.ne.s32.totalorder %s85, %s86
      %p100 = scmp.eq.s32.totalorder %s22, 1
      %p101 = por %p99, %p100
      %p103 = scmp.ne.s32.totalorder %s86, %s102
      %p104 = scmp.eq.s32.totalorder %s22, 0
      %p105 = por %p103, %p104
      %s106 = ssub.s32 %s23, %s35
      %s107 = ssub.s32 %s24, %s31
      %s108 = sor.u32 %s106, %s107
      %p109 = scmp.eq.s32.totalorder %s108, 0
      %s111 = sadd.s32 %s110, 1
      %s112 = scalar_select %p109, %s110, %s111
      %p115 = pneg %p109
      %p116 = scmp.eq.s32.totalorder %s16, 1
      %p117 = por %p115, %p116
      %p118 = scmp.ne.s32.totalorder %s110, %s113
      %p119 = scmp.eq.s32.totalorder %s16, 0
      %p120 = por %p118, %p119
      %p121 = scmp.ne.s32.totalorder %s110, %s113
      %p122 = scmp.eq.s32.totalorder %s21, 1
      %p123 = por %p121, %p122
      %p124 = scmp.ne.s32.totalorder %s113, %s114
      %p125 = scmp.eq.s32.totalorder %s21, 0
      %p126 = por %p124, %p125
      %p127 = scmp.ne.s32.totalorder %s113, %s114
      %p128 = scmp.eq.s32.totalorder %s22, 1
      %p129 = por %p127, %p128
      %p131 = scmp.ne.s32.totalorder %s114, %s130
      %p132 = scmp.eq.s32.totalorder %s22, 0
      %p133 = por %p131, %p132
      %p134 = scmp.le.s32.totalorder 1, %s16
      %p135 = scmp.lt.s32.totalorder %s16, 3
      %p136 = pnand %p134, %p135
      %p137 = pneg %p136
      // Predicated region
      $region9: #{tpu_custom_call.1} parent=5 // pred_check
        _
      $region10: #{tpu_custom_call.1} parent=5 // pred_check_branch
        %139 = sbr.rel (%p136) target = $region12
      $region11: #{tpu_custom_call.1} parent=5 // pred_region
        %s140 = ssub.s32 %s16, 1
        // Predicated region
        $region13: #{tpu_custom_call.1} parent=11 // pred_check
          %p141 = pneg %p49
        $region14: #{tpu_custom_call.1} parent=11 // pred_check_branch
          %143 = sbr.rel (%p141) target = $region16
        $region15: #{tpu_custom_call.1} parent=11 // pred_region
          %s145 = ssub.s32 128, 128
          %146 = vsyncadd [#allocation5], %s145
          %s148 = sshll.u32 %s0, 4
          %s149 = int_to_ptr.vmem [resolvable:$true] %s148
          %151 = dma.vmem_to_smem %s149, 128, [#allocation2], [#allocation5]
        $region16: #{tpu_custom_call.1} parent=11 // pred_fallthru
          _
        // Predicated region
        $region17: #{tpu_custom_call.1} parent=11 // pred_check
          %p152 = pneg %p70
        $region18: #{tpu_custom_call.1} parent=11 // pred_check_branch
          %154 = sbr.rel (%p152) target = $region20
        $region19: #{tpu_custom_call.1} parent=11 // pred_region
          _
        $region20: #{tpu_custom_call.1} parent=11 // pred_fallthru
          _
      $region12: #{tpu_custom_call.1} parent=5 // pred_fallthru
        _
      %p155 = scmp.lt.s32.totalorder %s16, 2
      // Predicated region
      $region21: #{tpu_custom_call.1} parent=5 // pred_check
        %p156 = pneg %p155
      $region22: #{tpu_custom_call.1} parent=5 // pred_check_branch
        %158 = sbr.rel (%p156) target = $region24
      $region23: #{tpu_custom_call.1} parent=5 // pred_region
        // Predicated region
        $region25: #{tpu_custom_call.1} parent=23 // pred_check
          %p159 = pneg %p92
        $region26: #{tpu_custom_call.1} parent=23 // pred_check_branch
          %161 = sbr.rel (%p159) target = $region28
        $region27: #{tpu_custom_call.1} parent=23 // pred_region
          %s162 = sand.u32 %s82, 1
          %s163 = scalar_lea.sflag [#allocation3], %s162
          %s164 = sand.u32 %s82, 1
          %s165 = smul.addr %s164, 32
          %s166 = scalar_lea.vmem [#allocation6], %s165
          %s168 = ssub.s32 512, 512
          %169 = vsyncadd %s163, %s168
          %s170 = smul.addr %s23, 4
          %s171 = sadd.s32 %s24, %s170
          %s172 = smul.addr %s171, 128
          %s173 = scalar_lea.hbm %s2, %s172
          %s174 = sshll.u32 %s166, 4
          %s175 = int_to_ptr.vmem [resolvable:$true] %s174
          %180 = dma.hbm_to_vmem [thread:$0]  %s173, 512, %s175, %s163, 128, 128, 8
        $region28: #{tpu_custom_call.1} parent=23 // pred_fallthru
          _
      $region24: #{tpu_custom_call.1} parent=5 // pred_fallthru
        _
      %p181 = scmp.le.s32.totalorder 1, %s16
      %p182 = scmp.lt.s32.totalorder %s16, 3
      %p183 = pnand %p181, %p182
      %p184 = pneg %p183
      // Predicated region
      $region29: #{tpu_custom_call.1} parent=5 // pred_check
        _
      $region30: #{tpu_custom_call.1} parent=5 // pred_check_branch
        %186 = sbr.rel (%p183) target = $region32
      $region31: #{tpu_custom_call.1} parent=5 // pred_region
        %s187 = ssub.s32 %s16, 1
        // Predicated region
        $region33: #{tpu_custom_call.1} parent=31 // pred_check
          %p188 = pneg %p49
        $region34: #{tpu_custom_call.1} parent=31 // pred_check_branch
          %190 = sbr.rel (%p188) target = $region36
        $region35: #{tpu_custom_call.1} parent=31 // pred_region
          %191 = dma.done [#allocation5], 128
        $region36: #{tpu_custom_call.1} parent=31 // pred_fallthru
          _
        %s192 = sand.u32 %s85, 1
        %s193 = scalar_lea.sflag [#allocation3], %s192
        %s194 = sand.u32 %s85, 1
        %s195 = smul.addr %s194, 32
        %s196 = scalar_lea.vmem [#allocation6], %s195
        // Predicated region
        $region37: #{tpu_custom_call.1} parent=31 // pred_check
          %p197 = pneg %p98
        $region38: #{tpu_custom_call.1} parent=31 // pred_check_branch
          %199 = sbr.rel (%p197) target = $region40
        $region39: #{tpu_custom_call.1} parent=31 // pred_region
          %200 = dma.done %s193, 512
        $region40: #{tpu_custom_call.1} parent=31 // pred_fallthru
          _
        %201 = sfence
        %p202 = pneg %p49
        %p203 = pneg %p46
        %p204 = pneg %p70
        %p205 = pneg %p67
        %s206 = sand.u32 %s85, 1
        %s207 = scalar_lea.sflag [#allocation3], %s206
        %s208 = sand.u32 %s85, 1
        %s209 = smul.addr %s208, 32
        %s210 = scalar_lea.vmem [#allocation6], %s209
        %p211 = pneg %p98
        %p212 = pneg %p95
        %p213 = pneg %p126
        %p214 = pneg %p123
        %s215 = sand.u32 %s113, 1
        %s216 = scalar_lea.sflag [#allocation4], %s215
        %s217 = sand.u32 %s113, 1
        %s218 = smul.addr %s217, 64
        %s219 = scalar_lea.vmem [#allocation7], %s218
        %v220 = vld [vmem:[%s1] sm:$0xff]
        %v221 = vld [vmem:[%s1 + $0x8] sm:$0xff]
        %v222 = vld [vmem:[%s1 + $0x10] sm:$0xff]
        %v223 = vld [vmem:[%s1 + $0x18] sm:$0xff]
        %v224 = vld [vmem:[%s196] sm:$0xff]
        %vm225 = vcmask 261120
        %v227 = vsel %vm225, %v224, 0
        %229 = vmatprep.subr.mxu0 0.0
        %v230 = vand.u32 %v220, 4294901760
        %231 = vmatpush1.msra.mxu0 %v230
        %232 = vmatprep.subr.mxu0 0.0
        %v233 = vand.u32 %v221, 4294901760
        %234 = vmatpush1.msra.mxu0 %v233
        %235 = vmatprep.subr.mxu0 0.0
        %v236 = vand.u32 %v222, 4294901760
        %237 = vmatpush1.msra.mxu0 %v236
        %238 = vmatprep.subr.mxu0 0.0
        %v239 = vand.u32 %v223, 4294901760
        %240 = vmatpush1.msra.mxu0 %v239
        %241 = vmatprep.subr.mxu0 0.0
        %242 = vmatpush1.msra.mxu0 0.0
        %243 = vmatprep.subr.mxu0 0.0
        %244 = vmatpush1.msra.mxu0 0.0
        %245 = vmatprep.subr.mxu0 0.0
        %246 = vmatpush1.msra.mxu0 0.0
        %247 = vmatprep.subr.mxu0 0.0
        %248 = vmatpush1.msra.mxu0 0.0
        %249 = vmatprep.subr.mxu0 0.0
        %250 = vmatpush1.msra.mxu0 0.0
        %251 = vmatprep.subr.mxu0 0.0
        %252 = vmatpush1.msra.mxu0 0.0
        %253 = vmatprep.subr.mxu0 0.0
        %254 = vmatpush1.msra.mxu0 0.0
        %255 = vmatprep.subr.mxu0 0.0
        %256 = vmatpush1.msra.mxu0 0.0
        %257 = vmatprep.subr.mxu0 0.0
        %258 = vmatpush1.msra.mxu0 0.0
        %259 = vmatprep.subr.mxu0 0.0
        %260 = vmatpush1.msra.mxu0 0.0
        %261 = vmatprep.subr.mxu0 0.0
        %262 = vmatpush1.msra.mxu0 0.0
        %263 = vmatprep.subr.mxu0 0.0
        %264 = vmatpush1.msra.mxu0 0.0
        %265 = vmatprep.subr.mxu0 0.0
        %266 = vmatpush1.msra.mxu0 0.0
        %267 = vmatprep.subr.mxu0 0.0
        %268 = vmatpush1.msra.mxu0 0.0
        %269 = vmatprep.subr.mxu0 0.0
        %270 = vmatpush1.msra.mxu0 0.0
        %271 = vmatprep.subr.mxu0 0.0
        %272 = vmatpush1.msra.mxu0 0.0
        %273 = vmatprep.subr.mxu0 0.0
        %274 = vmatpush1.msra.mxu0 0.0
        %275 = vmatprep.subr.mxu0 0.0
        %276 = vmatpush1.msra.mxu0 0.0
        %277 = vmatprep.subr.mxu0 0.0
        %278 = vmatpush1.msra.mxu0 0.0
        %279 = vmatprep.subr.mxu0 0.0
        %280 = vmatpush1.msra.mxu0 0.0
        %281 = vmatprep.subr.mxu0 0.0
        %282 = vmatpush1.msra.mxu0 0.0
        %283 = vmatprep.subr.mxu0 0.0
        %284 = vmatpush1.msra.mxu0 0.0
        %285 = vmatprep.subr.mxu0 0.0
        %286 = vmatpush1.msra.mxu0 0.0
        %287 = vmatprep.subr.mxu0 0.0
        %288 = vmatpush1.msra.mxu0 0.0
        %289 = vmatprep.subr.mxu0 0.0
        %290 = vmatpush1.msra.mxu0 0.0
        %291 = vmatprep.subr.mxu0 0.0
        %292 = vmatpush1.msra.mxu0 0.0
        %293 = vmatprep.subr.mxu0 0.0
        %294 = vmatpush1.msra.mxu0 0.0
        %295 = vmatprep.subr.mxu0 0.0
        %296 = vmatpush1.msra.mxu0 0.0
        %297 = vmatprep.mubr.f32.mxu0 0.0
        %v298 = vand.u32 %v227, 4294901760
        %v299 = vsub.f32 %v227, %v298
        %v300 = vand.u32 %v299, 4294901760
        %v301 = vsub.f32 %v299, %v300
        %v302 = vand.u32 %v301, 4294901760
        %303 = vmatmul.mubr.f32.gmra.mrb[0].mxu0 %v302
        %v304 = vpop.f32.mrb[0].mxu0
        %v305 = vadd.f32 0.0, %v304
        %v306 = vpop.f32.mrb[0].mxu0
        %307 = vdwg.mxu0
        %308 = vmatprep.subr.mxu0 0.0
        %v309 = vand.u32 %v220, 4294901760
        %v310 = vsub.f32 %v220, %v309
        %v311 = vand.u32 %v310, 4294901760
        %v312 = vsub.f32 %v310, %v311
        %v313 = vand.u32 %v312, 4294901760
        %314 = vmatpush1.msra.mxu0 %v313
        %315 = vmatprep.subr.mxu0 0.0
        %v316 = vand.u32 %v221, 4294901760
        %v317 = vsub.f32 %v221, %v316
        %v318 = vand.u32 %v317, 4294901760
        %v319 = vsub.f32 %v317, %v318
        %v320 = vand.u32 %v319, 4294901760
        %321 = vmatpush1.msra.mxu0 %v320
        %322 = vmatprep.subr.mxu0 0.0
        %v323 = vand.u32 %v222, 4294901760
        %v324 = vsub.f32 %v222, %v323
        %v325 = vand.u32 %v324, 4294901760
        %v326 = vsub.f32 %v324, %v325
        %v327 = vand.u32 %v326, 4294901760
        %328 = vmatpush1.msra.mxu0 %v327
        %329 = vmatprep.subr.mxu0 0.0
        %v330 = vand.u32 %v223, 4294901760
        %v331 = vsub.f32 %v223, %v330
        %v332 = vand.u32 %v331, 4294901760
        %v333 = vsub.f32 %v331, %v332
        %v334 = vand.u32 %v333, 4294901760
        %335 = vmatpush1.msra.mxu0 %v334
        %336 = vmatprep.subr.mxu0 0.0
        %337 = vmatpush1.msra.mxu0 0.0
        %338 = vmatprep.subr.mxu0 0.0
        %339 = vmatpush1.msra.mxu0 0.0
        %340 = vmatprep.subr.mxu0 0.0
        %341 = vmatpush1.msra.mxu0 0.0
        %342 = vmatprep.subr.mxu0 0.0
        %343 = vmatpush1.msra.mxu0 0.0
        %344 = vmatprep.subr.mxu0 0.0
        %345 = vmatpush1.msra.mxu0 0.0
        %346 = vmatprep.subr.mxu0 0.0
        %347 = vmatpush1.msra.mxu0 0.0
        %348 = vmatprep.subr.mxu0 0.0
        %349 = vmatpush1.msra.mxu0 0.0
        %350 = vmatprep.subr.mxu0 0.0
        %351 = vmatpush1.msra.mxu0 0.0
        %352 = vmatprep.subr.mxu0 0.0
        %353 = vmatpush1.msra.mxu0 0.0
        %354 = vmatprep.subr.mxu0 0.0
        %355 = vmatpush1.msra.mxu0 0.0
        %356 = vmatprep.subr.mxu0 0.0
        %357 = vmatpush1.msra.mxu0 0.0
        %358 = vmatprep.subr.mxu0 0.0
        %359 = vmatpush1.msra.mxu0 0.0
        %360 = vmatprep.subr.mxu0 0.0
        %361 = vmatpush1.msra.mxu0 0.0
        %362 = vmatprep.subr.mxu0 0.0
        %363 = vmatpush1.msra.mxu0 0.0
        %364 = vmatprep.subr.mxu0 0.0
        %365 = vmatpush1.msra.mxu0 0.0
        %366 = vmatprep.subr.mxu0 0.0
        %367 = vmatpush1.msra.mxu0 0.0
        %368 = vmatprep.subr.mxu0 0.0
        %369 = vmatpush1.msra.mxu0 0.0
        %370 = vmatprep.subr.mxu0 0.0
        %371 = vmatpush1.msra.mxu0 0.0
        %372 = vmatprep.subr.mxu0 0.0
        %373 = vmatpush1.msra.mxu0 0.0
        %374 = vmatprep.subr.mxu0 0.0
        %375 = vmatpush1.msra.mxu0 0.0
        %376 = vmatprep.subr.mxu0 0.0
        %377 = vmatpush1.msra.mxu0 0.0
        %378 = vmatprep.subr.mxu0 0.0
        %379 = vmatpush1.msra.mxu0 0.0
        %380 = vmatprep.subr.mxu0 0.0
        %381 = vmatpush1.msra.mxu0 0.0
        %382 = vmatprep.subr.mxu0 0.0
        %383 = vmatpush1.msra.mxu0 0.0
        %384 = vmatprep.subr.mxu0 0.0
        %385 = vmatpush1.msra.mxu0 0.0
        %386 = vmatprep.subr.mxu0 0.0
        %387 = vmatpush1.msra.mxu0 0.0
        %388 = vmatprep.subr.mxu0 0.0
        %389 = vmatpush1.msra.mxu0 0.0
        %390 = vmatprep.subr.mxu0 0.0
        %391 = vmatpush1.msra.mxu0 0.0
        %392 = vmatprep.mubr.f32.mxu0 0.0
        %v393 = vand.u32 %v227, 4294901760
        %394 = vmatmul.mubr.f32.gmra.mrb[0].mxu0 %v393
        %v395 = vpop.f32.mrb[0].mxu0
        %v396 = vadd.f32 %v305, %v395
        %v397 = vpop.f32.mrb[0].mxu0
        %398 = vdwg.mxu0
        %399 = vmatprep.subr.mxu0 0.0
        %v400 = vand.u32 %v220, 4294901760
        %v401 = vsub.f32 %v220, %v400
        %402 = vmatpush1.msra.mxu0 %v401
        %403 = vmatprep.subr.mxu0 0.0
        %v404 = vand.u32 %v221, 4294901760
        %v405 = vsub.f32 %v221, %v404
        %406 = vmatpush1.msra.mxu0 %v405
        %407 = vmatprep.subr.mxu0 0.0
        %v408 = vand.u32 %v222, 4294901760
        %v409 = vsub.f32 %v222, %v408
        %410 = vmatpush1.msra.mxu0 %v409
        %411 = vmatprep.subr.mxu0 0.0
        %v412 = vand.u32 %v223, 4294901760
        %v413 = vsub.f32 %v223, %v412
        %414 = vmatpush1.msra.mxu0 %v413
        %415 = vmatprep.subr.mxu0 0.0
        %416 = vmatpush1.msra.mxu0 0.0
        %417 = vmatprep.subr.mxu0 0.0
        %418 = vmatpush1.msra.mxu0 0.0
        %419 = vmatprep.subr.mxu0 0.0
        %420 = vmatpush1.msra.mxu0 0.0
        %421 = vmatprep.subr.mxu0 0.0
        %422 = vmatpush1.msra.mxu0 0.0
        %423 = vmatprep.subr.mxu0 0.0
        %424 = vmatpush1.msra.mxu0 0.0
        %425 = vmatprep.subr.mxu0 0.0
        %426 = vmatpush1.msra.mxu0 0.0
        %427 = vmatprep.subr.mxu0 0.0
        %428 = vmatpush1.msra.mxu0 0.0
        %429 = vmatprep.subr.mxu0 0.0
        %430 = vmatpush1.msra.mxu0 0.0
        %431 = vmatprep.subr.mxu0 0.0
        %432 = vmatpush1.msra.mxu0 0.0
        %433 = vmatprep.subr.mxu0 0.0
        %434 = vmatpush1.msra.mxu0 0.0
        %435 = vmatprep.subr.mxu0 0.0
        %436 = vmatpush1.msra.mxu0 0.0
        %437 = vmatprep.subr.mxu0 0.0
        %438 = vmatpush1.msra.mxu0 0.0
        %439 = vmatprep.subr.mxu0 0.0
        %440 = vmatpush1.msra.mxu0 0.0
        %441 = vmatprep.subr.mxu0 0.0
        %442 = vmatpush1.msra.mxu0 0.0
        %443 = vmatprep.subr.mxu0 0.0
        %444 = vmatpush1.msra.mxu0 0.0
        %445 = vmatprep.subr.mxu0 0.0
        %446 = vmatpush1.msra.mxu0 0.0
        %447 = vmatprep.subr.mxu0 0.0
        %448 = vmatpush1.msra.mxu0 0.0
        %449 = vmatprep.subr.mxu0 0.0
        %450 = vmatpush1.msra.mxu0 0.0
        %451 = vmatprep.subr.mxu0 0.0
        %452 = vmatpush1.msra.mxu0 0.0
        %453 = vmatprep.subr.mxu0 0.0
        %454 = vmatpush1.msra.mxu0 0.0
        %455 = vmatprep.subr.mxu0 0.0
        %456 = vmatpush1.msra.mxu0 0.0
        %457 = vmatprep.subr.mxu0 0.0
        %458 = vmatpush1.msra.mxu0 0.0
        %459 = vmatprep.subr.mxu0 0.0
        %460 = vmatpush1.msra.mxu0 0.0
        %461 = vmatprep.subr.mxu0 0.0
        %462 = vmatpush1.msra.mxu0 0.0
        %463 = vmatprep.subr.mxu0 0.0
        %464 = vmatpush1.msra.mxu0 0.0
        %465 = vmatprep.subr.mxu0 0.0
        %466 = vmatpush1.msra.mxu0 0.0
        %467 = vmatprep.subr.mxu0 0.0
        %468 = vmatpush1.msra.mxu0 0.0
        %469 = vmatprep.subr.mxu0 0.0
        %470 = vmatpush1.msra.mxu0 0.0
        %471 = vmatprep.mubr.f32.mxu0 0.0
        %v472 = vand.u32 %v227, 4294901760
        %v473 = vsub.f32 %v227, %v472
        %474 = vmatmul.mubr.f32.gmra.mrb[0].mxu0 %v473
        %v475 = vpop.f32.mrb[0].mxu0
        %v476 = vadd.f32 %v396, %v475
        %v477 = vpop.f32.mrb[0].mxu0
        %478 = vdwg.mxu0
        %479 = vmatprep.subr.mxu0 0.0
        %v480 = vand.u32 %v220, 4294901760
        %481 = vmatpush1.msra.mxu0 %v480
        %482 = vmatprep.subr.mxu0 0.0
        %v483 = vand.u32 %v221, 4294901760
        %484 = vmatpush1.msra.mxu0 %v483
        %485 = vmatprep.subr.mxu0 0.0
        %v486 = vand.u32 %v222, 4294901760
        %487 = vmatpush1.msra.mxu0 %v486
        %488 = vmatprep.subr.mxu0 0.0
        %v489 = vand.u32 %v223, 4294901760
        %490 = vmatpush1.msra.mxu0 %v489
        %491 = vmatprep.subr.mxu0 0.0
        %492 = vmatpush1.msra.mxu0 0.0
        %493 = vmatprep.subr.mxu0 0.0
        %494 = vmatpush1.msra.mxu0 0.0
        %495 = vmatprep.subr.mxu0 0.0
        %496 = vmatpush1.msra.mxu0 0.0
        %497 = vmatprep.subr.mxu0 0.0
        %498 = vmatpush1.msra.mxu0 0.0
        %499 = vmatprep.subr.mxu0 0.0
        %500 = vmatpush1.msra.mxu0 0.0
        %501 = vmatprep.subr.mxu0 0.0
        %502 = vmatpush1.msra.mxu0 0.0
        %503 = vmatprep.subr.mxu0 0.0
        %504 = vmatpush1.msra.mxu0 0.0
        %505 = vmatprep.subr.mxu0 0.0
        %506 = vmatpush1.msra.mxu0 0.0
        %507 = vmatprep.subr.mxu0 0.0
        %508 = vmatpush1.msra.mxu0 0.0
        %509 = vmatprep.subr.mxu0 0.0
        %510 = vmatpush1.msra.mxu0 0.0
        %511 = vmatprep.subr.mxu0 0.0
        %512 = vmatpush1.msra.mxu0 0.0
        %513 = vmatprep.subr.mxu0 0.0
        %514 = vmatpush1.msra.mxu0 0.0
        %515 = vmatprep.subr.mxu0 0.0
        %516 = vmatpush1.msra.mxu0 0.0
        %517 = vmatprep.subr.mxu0 0.0
        %518 = vmatpush1.msra.mxu0 0.0
        %519 = vmatprep.subr.mxu0 0.0
        %520 = vmatpush1.msra.mxu0 0.0
        %521 = vmatprep.subr.mxu0 0.0
        %522 = vmatpush1.msra.mxu0 0.0
        %523 = vmatprep.subr.mxu0 0.0
        %524 = vmatpush1.msra.mxu0 0.0
        %525 = vmatprep.subr.mxu0 0.0
        %526 = vmatpush1.msra.mxu0 0.0
        %527 = vmatprep.subr.mxu0 0.0
        %528 = vmatpush1.msra.mxu0 0.0
        %529 = vmatprep.subr.mxu0 0.0
        %530 = vmatpush1.msra.mxu0 0.0
        %531 = vmatprep.subr.mxu0 0.0
        %532 = vmatpush1.msra.mxu0 0.0
        %533 = vmatprep.subr.mxu0 0.0
        %534 = vmatpush1.msra.mxu0 0.0
        %535 = vmatprep.subr.mxu0 0.0
        %536 = vmatpush1.msra.mxu0 0.0
        %537 = vmatprep.subr.mxu0 0.0
        %538 = vmatpush1.msra.mxu0 0.0
        %539 = vmatprep.subr.mxu0 0.0
        %540 = vmatpush1.msra.mxu0 0.0
        %541 = vmatprep.subr.mxu0 0.0
        %542 = vmatpush1.msra.mxu0 0.0
        %543 = vmatprep.subr.mxu0 0.0
        %544 = vmatpush1.msra.mxu0 0.0
        %545 = vmatprep.subr.mxu0 0.0
        %546 = vmatpush1.msra.mxu0 0.0
        %547 = vmatprep.mubr.f32.mxu0 0.0
        %v548 = vand.u32 %v227, 4294901760
        %v549 = vsub.f32 %v227, %v548
        %v550 = vand.u32 %v549, 4294901760
        %551 = vmatmul.mubr.f32.gmra.mrb[0].mxu0 %v550
        %v552 = vpop.f32.mrb[0].mxu0
        %v553 = vadd.f32 %v476, %v552
        %v554 = vpop.f32.mrb[0].mxu0
        %555 = vdwg.mxu0
        %556 = vmatprep.subr.mxu0 0.0
        %v557 = vand.u32 %v220, 4294901760
        %v558 = vsub.f32 %v220, %v557
        %v559 = vand.u32 %v558, 4294901760
        %560 = vmatpush1.msra.mxu0 %v559
        %561 = vmatprep.subr.mxu0 0.0
        %v562 = vand.u32 %v221, 4294901760
        %v563 = vsub.f32 %v221, %v562
        %v564 = vand.u32 %v563, 4294901760
        %565 = vmatpush1.msra.mxu0 %v564
        %566 = vmatprep.subr.mxu0 0.0
        %v567 = vand.u32 %v222, 4294901760
        %v568 = vsub.f32 %v222, %v567
        %v569 = vand.u32 %v568, 4294901760
        %570 = vmatpush1.msra.mxu0 %v569
        %571 = vmatprep.subr.mxu0 0.0
        %v572 = vand.u32 %v223, 4294901760
        %v573 = vsub.f32 %v223, %v572
        %v574 = vand.u32 %v573, 4294901760
        %575 = vmatpush1.msra.mxu0 %v574
        %576 = vmatprep.subr.mxu0 0.0
        %577 = vmatpush1.msra.mxu0 0.0
        %578 = vmatprep.subr.mxu0 0.0
        %579 = vmatpush1.msra.mxu0 0.0
        %580 = vmatprep.subr.mxu0 0.0
        %581 = vmatpush1.msra.mxu0 0.0
        %582 = vmatprep.subr.mxu0 0.0
        %583 = vmatpush1.msra.mxu0 0.0
        %584 = vmatprep.subr.mxu0 0.0
        %585 = vmatpush1.msra.mxu0 0.0
        %586 = vmatprep.subr.mxu0 0.0
        %587 = vmatpush1.msra.mxu0 0.0
        %588 = vmatprep.subr.mxu0 0.0
        %589 = vmatpush1.msra.mxu0 0.0
        %590 = vmatprep.subr.mxu0 0.0
        %591 = vmatpush1.msra.mxu0 0.0
        %592 = vmatprep.subr.mxu0 0.0
        %593 = vmatpush1.msra.mxu0 0.0
        %594 = vmatprep.subr.mxu0 0.0
        %595 = vmatpush1.msra.mxu0 0.0
        %596 = vmatprep.subr.mxu0 0.0
        %597 = vmatpush1.msra.mxu0 0.0
        %598 = vmatprep.subr.mxu0 0.0
        %599 = vmatpush1.msra.mxu0 0.0
        %600 = vmatprep.subr.mxu0 0.0
        %601 = vmatpush1.msra.mxu0 0.0
        %602 = vmatprep.subr.mxu0 0.0
        %603 = vmatpush1.msra.mxu0 0.0
        %604 = vmatprep.subr.mxu0 0.0
        %605 = vmatpush1.msra.mxu0 0.0
        %606 = vmatprep.subr.mxu0 0.0
        %607 = vmatpush1.msra.mxu0 0.0
        %608 = vmatprep.subr.mxu0 0.0
        %609 = vmatpush1.msra.mxu0 0.0
        %610 = vmatprep.subr.mxu0 0.0
        %611 = vmatpush1.msra.mxu0 0.0
        %612 = vmatprep.subr.mxu0 0.0
        %613 = vmatpush1.msra.mxu0 0.0
        %614 = vmatprep.subr.mxu0 0.0
        %615 = vmatpush1.msra.mxu0 0.0
        %616 = vmatprep.subr.mxu0 0.0
        %617 = vmatpush1.msra.mxu0 0.0
        %618 = vmatprep.subr.mxu0 0.0
        %619 = vmatpush1.msra.mxu0 0.0
        %620 = vmatprep.subr.mxu0 0.0
        %621 = vmatpush1.msra.mxu0 0.0
        %622 = vmatprep.subr.mxu0 0.0
        %623 = vmatpush1.msra.mxu0 0.0
        %624 = vmatprep.subr.mxu0 0.0
        %625 = vmatpush1.msra.mxu0 0.0
        %626 = vmatprep.subr.mxu0 0.0
        %627 = vmatpush1.msra.mxu0 0.0
        %628 = vmatprep.subr.mxu0 0.0
        %629 = vmatpush1.msra.mxu0 0.0
        %630 = vmatprep.subr.mxu0 0.0
        %631 = vmatpush1.msra.mxu0 0.0
        %632 = vmatprep.mubr.f32.mxu0 0.0
        %v633 = vand.u32 %v227, 4294901760
        %634 = vmatmul.mubr.f32.gmra.mrb[0].mxu0 %v633
        %v635 = vpop.f32.mrb[0].mxu0
        %v636 = vadd.f32 %v553, %v635
        %v637 = vpop.f32.mrb[0].mxu0
        %638 = vdwg.mxu0
        %639 = vmatprep.subr.mxu0 0.0
        %v640 = vand.u32 %v220, 4294901760
        %641 = vmatpush1.msra.mxu0 %v640
        %642 = vmatprep.subr.mxu0 0.0
        %v643 = vand.u32 %v221, 4294901760
        %644 = vmatpush1.msra.mxu0 %v643
        %645 = vmatprep.subr.mxu0 0.0
        %v646 = vand.u32 %v222, 4294901760
        %647 = vmatpush1.msra.mxu0 %v646
        %648 = vmatprep.subr.mxu0 0.0
        %v649 = vand.u32 %v223, 4294901760
        %650 = vmatpush1.msra.mxu0 %v649
        %651 = vmatprep.subr.mxu0 0.0
        %652 = vmatpush1.msra.mxu0 0.0
        %653 = vmatprep.subr.mxu0 0.0
        %654 = vmatpush1.msra.mxu0 0.0
        %655 = vmatprep.subr.mxu0 0.0
        %656 = vmatpush1.msra.mxu0 0.0
        %657 = vmatprep.subr.mxu0 0.0
        %658 = vmatpush1.msra.mxu0 0.0
        %659 = vmatprep.subr.mxu0 0.0
        %660 = vmatpush1.msra.mxu0 0.0
        %661 = vmatprep.subr.mxu0 0.0
        %662 = vmatpush1.msra.mxu0 0.0
        %663 = vmatprep.subr.mxu0 0.0
        %664 = vmatpush1.msra.mxu0 0.0
        %665 = vmatprep.subr.mxu0 0.0
        %666 = vmatpush1.msra.mxu0 0.0
        %667 = vmatprep.subr.mxu0 0.0
        %668 = vmatpush1.msra.mxu0 0.0
        %669 = vmatprep.subr.mxu0 0.0
        %670 = vmatpush1.msra.mxu0 0.0
        %671 = vmatprep.subr.mxu0 0.0
        %672 = vmatpush1.msra.mxu0 0.0
        %673 = vmatprep.subr.mxu0 0.0
        %674 = vmatpush1.msra.mxu0 0.0
        %675 = vmatprep.subr.mxu0 0.0
        %676 = vmatpush1.msra.mxu0 0.0
        %677 = vmatprep.subr.mxu0 0.0
        %678 = vmatpush1.msra.mxu0 0.0
        %679 = vmatprep.subr.mxu0 0.0
        %680 = vmatpush1.msra.mxu0 0.0
        %681 = vmatprep.subr.mxu0 0.0
        %682 = vmatpush1.msra.mxu0 0.0
        %683 = vmatprep.subr.mxu0 0.0
        %684 = vmatpush1.msra.mxu0 0.0
        %685 = vmatprep.subr.mxu0 0.0
        %686 = vmatpush1.msra.mxu0 0.0
        %687 = vmatprep.subr.mxu0 0.0
        %688 = vmatpush1.msra.mxu0 0.0
        %689 = vmatprep.subr.mxu0 0.0
        %690 = vmatpush1.msra.mxu0 0.0
        %691 = vmatprep.subr.mxu0 0.0
        %692 = vmatpush1.msra.mxu0 0.0
        %693 = vmatprep.subr.mxu0 0.0
        %694 = vmatpush1.msra.mxu0 0.0
        %695 = vmatprep.subr.mxu0 0.0
        %696 = vmatpush1.msra.mxu0 0.0
        %697 = vmatprep.subr.mxu0 0.0
        %698 = vmatpush1.msra.mxu0 0.0
        %699 = vmatprep.subr.mxu0 0.0
        %700 = vmatpush1.msra.mxu0 0.0
        %701 = vmatprep.subr.mxu0 0.0
        %702 = vmatpush1.msra.mxu0 0.0
        %703 = vmatprep.subr.mxu0 0.0
        %704 = vmatpush1.msra.mxu0 0.0
        %705 = vmatprep.subr.mxu0 0.0
        %706 = vmatpush1.msra.mxu0 0.0
        %707 = vmatprep.mubr.f32.mxu0 0.0
        %v708 = vand.u32 %v227, 4294901760
        %709 = vmatmul.mubr.f32.gmra.mrb[0].mxu0 %v708
        %v710 = vpop.f32.mrb[0].mxu0
        %v711 = vadd.f32 %v636, %v710
        %v712 = vpop.f32.mrb[0].mxu0
        %713 = vdwg.mxu0
        %s714 = scalar_lea.vmem %s196, 8 [#allocation6]
        %v715 = vld [vmem:[%s714] sm:$0xff]
        %v717 = vsel %vm225, %v715, 0
        %719 = vmatprep.subr.mxu0 0.0
        %v720 = vand.u32 %v220, 4294901760
        %721 = vmatpush1.msra.mxu0 %v720
        %722 = vmatprep.subr.mxu0 0.0
        %v723 = vand.u32 %v221, 4294901760
        %724 = vmatpush1.msra.mxu0 %v723
        %725 = vmatprep.subr.mxu0 0.0
        %v726 = vand.u32 %v222, 4294901760
        %727 = vmatpush1.msra.mxu0 %v726
        %728 = vmatprep.subr.mxu0 0.0
        %v729 = vand.u32 %v223, 4294901760
        %730 = vmatpush1.msra.mxu0 %v729
        %731 = vmatprep.subr.mxu0 0.0
        %732 = vmatpush1.msra.mxu0 0.0
        %733 = vmatprep.subr.mxu0 0.0
        %734 = vmatpush1.msra.mxu0 0.0
        %735 = vmatprep.subr.mxu0 0.0
        %736 = vmatpush1.msra.mxu0 0.0
        %737 = vmatprep.subr.mxu0 0.0
        %738 = vmatpush1.msra.mxu0 0.0
        %739 = vmatprep.subr.mxu0 0.0
        %740 = vmatpush1.msra.mxu0 0.0
        %741 = vmatprep.subr.mxu0 0.0
        %742 = vmatpush1.msra.mxu0 0.0
        %743 = vmatprep.subr.mxu0 0.0
        %744 = vmatpush1.msra.mxu0 0.0
        %745 = vmatprep.subr.mxu0 0.0
        %746 = vmatpush1.msra.mxu0 0.0
        %747 = vmatprep.subr.mxu0 0.0
        %748 = vmatpush1.msra.mxu0 0.0
        %749 = vmatprep.subr.mxu0 0.0
        %750 = vmatpush1.msra.mxu0 0.0
        %751 = vmatprep.subr.mxu0 0.0
        %752 = vmatpush1.msra.mxu0 0.0
        %753 = vmatprep.subr.mxu0 0.0
        %754 = vmatpush1.msra.mxu0 0.0
        %755 = vmatprep.subr.mxu0 0.0
        %756 = vmatpush1.msra.mxu0 0.0
        %757 = vmatprep.subr.mxu0 0.0
        %758 = vmatpush1.msra.mxu0 0.0
        %759 = vmatprep.subr.mxu0 0.0
        %760 = vmatpush1.msra.mxu0 0.0
        %761 = vmatprep.subr.mxu0 0.0
        %762 = vmatpush1.msra.mxu0 0.0
        %763 = vmatprep.subr.mxu0 0.0
        %764 = vmatpush1.msra.mxu0 0.0
        %765 = vmatprep.subr.mxu0 0.0
        %766 = vmatpush1.msra.mxu0 0.0
        %767 = vmatprep.subr.mxu0 0.0
        %768 = vmatpush1.msra.mxu0 0.0
        %769 = vmatprep.subr.mxu0 0.0
        %770 = vmatpush1.msra.mxu0 0.0
        %771 = vmatprep.subr.mxu0 0.0
        %772 = vmatpush1.msra.mxu0 0.0
        %773 = vmatprep.subr.mxu0 0.0
        %774 = vmatpush1.msra.mxu0 0.0
        %775 = vmatprep.subr.mxu0 0.0
        %776 = vmatpush1.msra.mxu0 0.0
        %777 = vmatprep.subr.mxu0 0.0
        %778 = vmatpush1.msra.mxu0 0.0
        %779 = vmatprep.subr.mxu0 0.0
        %780 = vmatpush1.msra.mxu0 0.0
        %781 = vmatprep.subr.mxu0 0.0
        %782 = vmatpush1.msra.mxu0 0.0
        %783 = vmatprep.subr.mxu0 0.0
        %784 = vmatpush1.msra.mxu0 0.0
        %785 = vmatprep.subr.mxu0 0.0
        %786 = vmatpush1.msra.mxu0 0.0
        %787 = vmatprep.mubr.f32.mxu0 0.0
        %v788 = vand.u32 %v717, 4294901760
        %v789 = vsub.f32 %v717, %v788
        %v790 = vand.u32 %v789, 4294901760
        %v791 = vsub.f32 %v789, %v790
        %v792 = vand.u32 %v791, 4294901760
        %793 = vmatmul.mubr.f32.gmra.mrb[0].mxu0 %v792
        %v794 = vpop.f32.mrb[0].mxu0
        %v795 = vadd.f32 0.0, %v794
        %v796 = vpop.f32.mrb[0].mxu0
        %797 = vdwg.mxu0
        %798 = vmatprep.subr.mxu0 0.0
        %v799 = vand.u32 %v220, 4294901760
        %v800 = vsub.f32 %v220, %v799
        %v801 = vand.u32 %v800, 4294901760
        %v802 = vsub.f32 %v800, %v801
        %v803 = vand.u32 %v802, 4294901760
        %804 = vmatpush1.msra.mxu0 %v803
        %805 = vmatprep.subr.mxu0 0.0
        %v806 = vand.u32 %v221, 4294901760
        %v807 = vsub.f32 %v221, %v806
        %v808 = vand.u32 %v807, 4294901760
        %v809 = vsub.f32 %v807, %v808
        %v810 = vand.u32 %v809, 4294901760
        %811 = vmatpush1.msra.mxu0 %v810
        %812 = vmatprep.subr.mxu0 0.0
        %v813 = vand.u32 %v222, 4294901760
        %v814 = vsub.f32 %v222, %v813
        %v815 = vand.u32 %v814, 4294901760
        %v816 = vsub.f32 %v814, %v815
        %v817 = vand.u32 %v816, 4294901760
        %818 = vmatpush1.msra.mxu0 %v817
        %819 = vmatprep.subr.mxu0 0.0
        %v820 = vand.u32 %v223, 4294901760
        %v821 = vsub.f32 %v223, %v820
        %v822 = vand.u32 %v821, 4294901760
        %v823 = vsub.f32 %v821, %v822
        %v824 = vand.u32 %v823, 4294901760
        %825 = vmatpush1.msra.mxu0 %v824
        %826 = vmatprep.subr.mxu0 0.0
        %827 = vmatpush1.msra.mxu0 0.0
        %828 = vmatprep.subr.mxu0 0.0
        %829 = vmatpush1.msra.mxu0 0.0
        %830 = vmatprep.subr.mxu0 0.0
        %831 = vmatpush1.msra.mxu0 0.0
        %832 = vmatprep.subr.mxu0 0.0
        %833 = vmatpush1.msra.mxu0 0.0
        %834 = vmatprep.subr.mxu0 0.0
        %835 = vmatpush1.msra.mxu0 0.0
        %836 = vmatprep.subr.mxu0 0.0
        %837 = vmatpush1.msra.mxu0 0.0
        %838 = vmatprep.subr.mxu0 0.0
        %839 = vmatpush1.msra.mxu0 0.0
        %840 = vmatprep.subr.mxu0 0.0
        %841 = vmatpush1.msra.mxu0 0.0
        %842 = vmatprep.subr.mxu0 0.0
        %843 = vmatpush1.msra.mxu0 0.0
        %844 = vmatprep.subr.mxu0 0.0
        %845 = vmatpush1.msra.mxu0 0.0
        %846 = vmatprep.subr.mxu0 0.0
        %847 = vmatpush1.msra.mxu0 0.0
        %848 = vmatprep.subr.mxu0 0.0
        %849 = vmatpush1.msra.mxu0 0.0
        %850 = vmatprep.subr.mxu0 0.0
        %851 = vmatpush1.msra.mxu0 0.0
        %852 = vmatprep.subr.mxu0 0.0
        %853 = vmatpush1.msra.mxu0 0.0
        %854 = vmatprep.subr.mxu0 0.0
        %855 = vmatpush1.msra.mxu0 0.0
        %856 = vmatprep.subr.mxu0 0.0
        %857 = vmatpush1.msra.mxu0 0.0
        %858 = vmatprep.subr.mxu0 0.0
        %859 = vmatpush1.msra.mxu0 0.0
        %860 = vmatprep.subr.mxu0 0.0
        %861 = vmatpush1.msra.mxu0 0.0
        %862 = vmatprep.subr.mxu0 0.0
        %863 = vmatpush1.msra.mxu0 0.0
        %864 = vmatprep.subr.mxu0 0.0
        %865 = vmatpush1.msra.mxu0 0.0
        %866 = vmatprep.subr.mxu0 0.0
        %867 = vmatpush1.msra.mxu0 0.0
        %868 = vmatprep.subr.mxu0 0.0
        %869 = vmatpush1.msra.mxu0 0.0
        %870 = vmatprep.subr.mxu0 0.0
        %871 = vmatpush1.msra.mxu0 0.0
        %872 = vmatprep.subr.mxu0 0.0
        %873 = vmatpush1.msra.mxu0 0.0
        %874 = vmatprep.subr.mxu0 0.0
        %875 = vmatpush1.msra.mxu0 0.0
        %876 = vmatprep.subr.mxu0 0.0
        %877 = vmatpush1.msra.mxu0 0.0
        %878 = vmatprep.subr.mxu0 0.0
        %879 = vmatpush1.msra.mxu0 0.0
        %880 = vmatprep.subr.mxu0 0.0
        %881 = vmatpush1.msra.mxu0 0.0
        %882 = vmatprep.mubr.f32.mxu0 0.0
        %v883 = vand.u32 %v717, 4294901760
        %884 = vmatmul.mubr.f32.gmra.mrb[0].mxu0 %v883
        %v885 = vpop.f32.mrb[0].mxu0
        %v886 = vadd.f32 %v795, %v885
        %v887 = vpop.f32.mrb[0].mxu0
        %888 = vdwg.mxu0
        %889 = vmatprep.subr.mxu0 0.0
        %v890 = vand.u32 %v220, 4294901760
        %v891 = vsub.f32 %v220, %v890
        %892 = vmatpush1.msra.mxu0 %v891
        %893 = vmatprep.subr.mxu0 0.0
        %v894 = vand.u32 %v221, 4294901760
        %v895 = vsub.f32 %v221, %v894
        %896 = vmatpush1.msra.mxu0 %v895
        %897 = vmatprep.subr.mxu0 0.0
        %v898 = vand.u32 %v222, 4294901760
        %v899 = vsub.f32 %v222, %v898
        %900 = vmatpush1.msra.mxu0 %v899
        %901 = vmatprep.subr.mxu0 0.0
        %v902 = vand.u32 %v223, 4294901760
        %v903 = vsub.f32 %v223, %v902
        %904 = vmatpush1.msra.mxu0 %v903
        %905 = vmatprep.subr.mxu0 0.0
        %906 = vmatpush1.msra.mxu0 0.0
        %907 = vmatprep.subr.mxu0 0.0
        %908 = vmatpush1.msra.mxu0 0.0
        %909 = vmatprep.subr.mxu0 0.0
        %910 = vmatpush1.msra.mxu0 0.0
        %911 = vmatprep.subr.mxu0 0.0
        %912 = vmatpush1.msra.mxu0 0.0
        %913 = vmatprep.subr.mxu0 0.0
        %914 = vmatpush1.msra.mxu0 0.0
        %915 = vmatprep.subr.mxu0 0.0
        %916 = vmatpush1.msra.mxu0 0.0
        %917 = vmatprep.subr.mxu0 0.0
        %918 = vmatpush1.msra.mxu0 0.0
        %919 = vmatprep.subr.mxu0 0.0
        %920 = vmatpush1.msra.mxu0 0.0
        %921 = vmatprep.subr.mxu0 0.0
        %922 = vmatpush1.msra.mxu0 0.0
        %923 = vmatprep.subr.mxu0 0.0
        %924 = vmatpush1.msra.mxu0 0.0
        %925 = vmatprep.subr.mxu0 0.0
        %926 = vmatpush1.msra.mxu0 0.0
        %927 = vmatprep.subr.mxu0 0.0
        %928 = vmatpush1.msra.mxu0 0.0
        %929 = vmatprep.subr.mxu0 0.0
        %930 = vmatpush1.msra.mxu0 0.0
        %931 = vmatprep.subr.mxu0 0.0
        %932 = vmatpush1.msra.mxu0 0.0
        %933 = vmatprep.subr.mxu0 0.0
        %934 = vmatpush1.msra.mxu0 0.0
        %935 = vmatprep.subr.mxu0 0.0
        %936 = vmatpush1.msra.mxu0 0.0
        %937 = vmatprep.subr.mxu0 0.0
        %938 = vmatpush1.msra.mxu0 0.0
        %939 = vmatprep.subr.mxu0 0.0
        %940 = vmatpush1.msra.mxu0 0.0
        %941 = vmatprep.subr.mxu0 0.0
        %942 = vmatpush1.msra.mxu0 0.0
        %943 = vmatprep.subr.mxu0 0.0
        %944 = vmatpush1.msra.mxu0 0.0
        %945 = vmatprep.subr.mxu0 0.0
        %946 = vmatpush1.msra.mxu0 0.0
        %947 = vmatprep.subr.mxu0 0.0
        %948 = vmatpush1.msra.mxu0 0.0
        %949 = vmatprep.subr.mxu0 0.0
        %950 = vmatpush1.msra.mxu0 0.0
        %951 = vmatprep.subr.mxu0 0.0
        %952 = vmatpush1.msra.mxu0 0.0
        %953 = vmatprep.subr.mxu0 0.0
        %954 = vmatpush1.msra.mxu0 0.0
        %955 = vmatprep.subr.mxu0 0.0
        %956 = vmatpush1.msra.mxu0 0.0
        %957 = vmatprep.subr.mxu0 0.0
        %958 = vmatpush1.msra.mxu0 0.0
        %959 = vmatprep.subr.mxu0 0.0
        %960 = vmatpush1.msra.mxu0 0.0
        %961 = vmatprep.mubr.f32.mxu0 0.0
        %v962 = vand.u32 %v717, 4294901760
        %v963 = vsub.f32 %v717, %v962
        %964 = vmatmul.mubr.f32.gmra.mrb[0].mxu0 %v963
        %v965 = vpop.f32.mrb[0].mxu0
        %v966 = vadd.f32 %v886, %v965
        %v967 = vpop.f32.mrb[0].mxu0
        %968 = vdwg.mxu0
        %969 = vmatprep.subr.mxu0 0.0
        %v970 = vand.u32 %v220, 4294901760
        %971 = vmatpush1.msra.mxu0 %v970
        %972 = vmatprep.subr.mxu0 0.0
        %v973 = vand.u32 %v221, 4294901760
        %974 = vmatpush1.msra.mxu0 %v973
        %975 = vmatprep.subr.mxu0 0.0
        %v976 = vand.u32 %v222, 4294901760
        %977 = vmatpush1.msra.mxu0 %v976
        %978 = vmatprep.subr.mxu0 0.0
        %v979 = vand.u32 %v223, 4294901760
        %980 = vmatpush1.msra.mxu0 %v979
        %981 = vmatprep.subr.mxu0 0.0
        %982 = vmatpush1.msra.mxu0 0.0
        %983 = vmatprep.subr.mxu0 0.0
        %984 = vmatpush1.msra.mxu0 0.0
        %985 = vmatprep.subr.mxu0 0.0
        %986 = vmatpush1.msra.mxu0 0.0
        %987 = vmatprep.subr.mxu0 0.0
        %988 = vmatpush1.msra.mxu0 0.0
        %989 = vmatprep.subr.mxu0 0.0
        %990 = vmatpush1.msra.mxu0 0.0
        %991 = vmatprep.subr.mxu0 0.0
        %992 = vmatpush1.msra.mxu0 0.0
        %993 = vmatprep.subr.mxu0 0.0
        %994 = vmatpush1.msra.mxu0 0.0
        %995 = vmatprep.subr.mxu0 0.0
        %996 = vmatpush1.msra.mxu0 0.0
        %997 = vmatprep.subr.mxu0 0.0
        %998 = vmatpush1.msra.mxu0 0.0
        %999 = vmatprep.subr.mxu0 0.0
        %1000 = vmatpush1.msra.mxu0 0.0
        %1001 = vmatprep.subr.mxu0 0.0
        %1002 = vmatpush1.msra.mxu0 0.0
        %1003 = vmatprep.subr.mxu0 0.0
        %1004 = vmatpush1.msra.mxu0 0.0
        %1005 = vmatprep.subr.mxu0 0.0
        %1006 = vmatpush1.msra.mxu0 0.0
        %1007 = vmatprep.subr.mxu0 0.0
        %1008 = vmatpush1.msra.mxu0 0.0
        %1009 = vmatprep.subr.mxu0 0.0
        %1010 = vmatpush1.msra.mxu0 0.0
        %1011 = vmatprep.subr.mxu0 0.0
        %1012 = vmatpush1.msra.mxu0 0.0
        %1013 = vmatprep.subr.mxu0 0.0
        %1014 = vmatpush1.msra.mxu0 0.0
        %1015 = vmatprep.subr.mxu0 0.0
        %1016 = vmatpush1.msra.mxu0 0.0
        %1017 = vmatprep.subr.mxu0 0.0
        %1018 = vmatpush1.msra.mxu0 0.0
        %1019 = vmatprep.subr.mxu0 0.0
        %1020 = vmatpush1.msra.mxu0 0.0
        %1021 = vmatprep.subr.mxu0 0.0
        %1022 = vmatpush1.msra.mxu0 0.0
        %1023 = vmatprep.subr.mxu0 0.0
        %1024 = vmatpush1.msra.mxu0 0.0
        %1025 = vmatprep.subr.mxu0 0.0
        %1026 = vmatpush1.msra.mxu0 0.0
        %1027 = vmatprep.subr.mxu0 0.0
        %1028 = vmatpush1.msra.mxu0 0.0
        %1029 = vmatprep.subr.mxu0 0.0
        %1030 = vmatpush1.msra.mxu0 0.0
        %1031 = vmatprep.subr.mxu0 0.0
        %1032 = vmatpush1.msra.mxu0 0.0
        %1033 = vmatprep.subr.mxu0 0.0
        %1034 = vmatpush1.msra.mxu0 0.0
        %1035 = vmatprep.subr.mxu0 0.0
        %1036 = vmatpush1.msra.mxu0 0.0
        %1037 = vmatprep.mubr.f32.mxu0 0.0
        %v1038 = vand.u32 %v717, 4294901760
        %v1039 = vsub.f32 %v717, %v1038
        %v1040 = vand.u32 %v1039, 4294901760
        %1041 = vmatmul.mubr.f32.gmra.mrb[0].mxu0 %v1040
        %v1042 = vpop.f32.mrb[0].mxu0
        %v1043 = vadd.f32 %v966, %v1042
        %v1044 = vpop.f32.mrb[0].mxu0
        %1045 = vdwg.mxu0
        %1046 = vmatprep.subr.mxu0 0.0
        %v1047 = vand.u32 %v220, 4294901760
        %v1048 = vsub.f32 %v220, %v1047
        %v1049 = vand.u32 %v1048, 4294901760
        %1050 = vmatpush1.msra.mxu0 %v1049
        %1051 = vmatprep.subr.mxu0 0.0
        %v1052 = vand.u32 %v221, 4294901760
        %v1053 = vsub.f32 %v221, %v1052
        %v1054 = vand.u32 %v1053, 4294901760
        %1055 = vmatpush1.msra.mxu0 %v1054
        %1056 = vmatprep.subr.mxu0 0.0
        %v1057 = vand.u32 %v222, 4294901760
        %v1058 = vsub.f32 %v222, %v1057
        %v1059 = vand.u32 %v1058, 4294901760
        %1060 = vmatpush1.msra.mxu0 %v1059
        %1061 = vmatprep.subr.mxu0 0.0
        %v1062 = vand.u32 %v223, 4294901760
        %v1063 = vsub.f32 %v223, %v1062
        %v1064 = vand.u32 %v1063, 4294901760
        %1065 = vmatpush1.msra.mxu0 %v1064
        %1066 = vmatprep.subr.mxu0 0.0
        %1067 = vmatpush1.msra.mxu0 0.0
        %1068 = vmatprep.subr.mxu0 0.0
        %1069 = vmatpush1.msra.mxu0 0.0
        %1070 = vmatprep.subr.mxu0 0.0
        %1071 = vmatpush1.msra.mxu0 0.0
        %1072 = vmatprep.subr.mxu0 0.0
        %1073 = vmatpush1.msra.mxu0 0.0
        %1074 = vmatprep.subr.mxu0 0.0
        %1075 = vmatpush1.msra.mxu0 0.0
        %1076 = vmatprep.subr.mxu0 0.0
        %1077 = vmatpush1.msra.mxu0 0.0
        %1078 = vmatprep.subr.mxu0 0.0
        %1079 = vmatpush1.msra.mxu0 0.0
        %1080 = vmatprep.subr.mxu0 0.0
        %1081 = vmatpush1.msra.mxu0 0.0
        %1082 = vmatprep.subr.mxu0 0.0
        %1083 = vmatpush1.msra.mxu0 0.0
        %1084 = vmatprep.subr.mxu0 0.0
        %1085 = vmatpush1.msra.mxu0 0.0
        %1086 = vmatprep.subr.mxu0 0.0
        %1087 = vmatpush1.msra.mxu0 0.0
        %1088 = vmatprep.subr.mxu0 0.0
        %1089 = vmatpush1.msra.mxu0 0.0
        %1090 = vmatprep.subr.mxu0 0.0
        %1091 = vmatpush1.msra.mxu0 0.0
        %1092 = vmatprep.subr.mxu0 0.0
        %1093 = vmatpush1.msra.mxu0 0.0
        %1094 = vmatprep.subr.mxu0 0.0
        %1095 = vmatpush1.msra.mxu0 0.0
        %1096 = vmatprep.subr.mxu0 0.0
        %1097 = vmatpush1.msra.mxu0 0.0
        %1098 = vmatprep.subr.mxu0 0.0
        %1099 = vmatpush1.msra.mxu0 0.0
        %1100 = vmatprep.subr.mxu0 0.0
        %1101 = vmatpush1.msra.mxu0 0.0
        %1102 = vmatprep.subr.mxu0 0.0
        %1103 = vmatpush1.msra.mxu0 0.0
        %1104 = vmatprep.subr.mxu0 0.0
        %1105 = vmatpush1.msra.mxu0 0.0
        %1106 = vmatprep.subr.mxu0 0.0
        %1107 = vmatpush1.msra.mxu0 0.0
        %1108 = vmatprep.subr.mxu0 0.0
        %1109 = vmatpush1.msra.mxu0 0.0
        %1110 = vmatprep.subr.mxu0 0.0
        %1111 = vmatpush1.msra.mxu0 0.0
        %1112 = vmatprep.subr.mxu0 0.0
        %1113 = vmatpush1.msra.mxu0 0.0
        %1114 = vmatprep.subr.mxu0 0.0
        %1115 = vmatpush1.msra.mxu0 0.0
        %1116 = vmatprep.subr.mxu0 0.0
        %1117 = vmatpush1.msra.mxu0 0.0
        %1118 = vmatprep.subr.mxu0 0.0
        %1119 = vmatpush1.msra.mxu0 0.0
        %1120 = vmatprep.subr.mxu0 0.0
        %1121 = vmatpush1.msra.mxu0 0.0
        %1122 = vmatprep.mubr.f32.mxu0 0.0
        %v1123 = vand.u32 %v717, 4294901760
        %1124 = vmatmul.mubr.f32.gmra.mrb[0].mxu0 %v1123
        %v1125 = vpop.f32.mrb[0].mxu0
        %v1126 = vadd.f32 %v1043, %v1125
        %v1127 = vpop.f32.mrb[0].mxu0
        %1128 = vdwg.mxu0
        %1129 = vmatprep.subr.mxu0 0.0
        %v1130 = vand.u32 %v220, 4294901760
        %1131 = vmatpush1.msra.mxu0 %v1130
        %1132 = vmatprep.subr.mxu0 0.0
        %v1133 = vand.u32 %v221, 4294901760
        %1134 = vmatpush1.msra.mxu0 %v1133
        %1135 = vmatprep.subr.mxu0 0.0
        %v1136 = vand.u32 %v222, 4294901760
        %1137 = vmatpush1.msra.mxu0 %v1136
        %1138 = vmatprep.subr.mxu0 0.0
        %v1139 = vand.u32 %v223, 4294901760
        %1140 = vmatpush1.msra.mxu0 %v1139
        %1141 = vmatprep.subr.mxu0 0.0
        %1142 = vmatpush1.msra.mxu0 0.0
        %1143 = vmatprep.subr.mxu0 0.0
        %1144 = vmatpush1.msra.mxu0 0.0
        %1145 = vmatprep.subr.mxu0 0.0
        %1146 = vmatpush1.msra.mxu0 0.0
        %1147 = vmatprep.subr.mxu0 0.0
        %1148 = vmatpush1.msra.mxu0 0.0
        %1149 = vmatprep.subr.mxu0 0.0
        %1150 = vmatpush1.msra.mxu0 0.0
        %1151 = vmatprep.subr.mxu0 0.0
        %1152 = vmatpush1.msra.mxu0 0.0
        %1153 = vmatprep.subr.mxu0 0.0
        %1154 = vmatpush1.msra.mxu0 0.0
        %1155 = vmatprep.subr.mxu0 0.0
        %1156 = vmatpush1.msra.mxu0 0.0
        %1157 = vmatprep.subr.mxu0 0.0
        %1158 = vmatpush1.msra.mxu0 0.0
        %1159 = vmatprep.subr.mxu0 0.0
        %1160 = vmatpush1.msra.mxu0 0.0
        %1161 = vmatprep.subr.mxu0 0.0
        %1162 = vmatpush1.msra.mxu0 0.0
        %1163 = vmatprep.subr.mxu0 0.0
        %1164 = vmatpush1.msra.mxu0 0.0
        %1165 = vmatprep.subr.mxu0 0.0
        %1166 = vmatpush1.msra.mxu0 0.0
        %1167 = vmatprep.subr.mxu0 0.0
        %1168 = vmatpush1.msra.mxu0 0.0
        %1169 = vmatprep.subr.mxu0 0.0
        %1170 = vmatpush1.msra.mxu0 0.0
        %1171 = vmatprep.subr.mxu0 0.0
        %1172 = vmatpush1.msra.mxu0 0.0
        %1173 = vmatprep.subr.mxu0 0.0
        %1174 = vmatpush1.msra.mxu0 0.0
        %1175 = vmatprep.subr.mxu0 0.0
        %1176 = vmatpush1.msra.mxu0 0.0
        %1177 = vmatprep.subr.mxu0 0.0
        %1178 = vmatpush1.msra.mxu0 0.0
        %1179 = vmatprep.subr.mxu0 0.0
        %1180 = vmatpush1.msra.mxu0 0.0
        %1181 = vmatprep.subr.mxu0 0.0
        %1182 = vmatpush1.msra.mxu0 0.0
        %1183 = vmatprep.subr.mxu0 0.0
        %1184 = vmatpush1.msra.mxu0 0.0
        %1185 = vmatprep.subr.mxu0 0.0
        %1186 = vmatpush1.msra.mxu0 0.0
        %1187 = vmatprep.subr.mxu0 0.0
        %1188 = vmatpush1.msra.mxu0 0.0
        %1189 = vmatprep.subr.mxu0 0.0
        %1190 = vmatpush1.msra.mxu0 0.0
        %1191 = vmatprep.subr.mxu0 0.0
        %1192 = vmatpush1.msra.mxu0 0.0
        %1193 = vmatprep.subr.mxu0 0.0
        %1194 = vmatpush1.msra.mxu0 0.0
        %1195 = vmatprep.subr.mxu0 0.0
        %1196 = vmatpush1.msra.mxu0 0.0
        %1197 = vmatprep.mubr.f32.mxu0 0.0
        %v1198 = vand.u32 %v717, 4294901760
        %1199 = vmatmul.mubr.f32.gmra.mrb[0].mxu0 %v1198
        %v1200 = vpop.f32.mrb[0].mxu0
        %v1201 = vadd.f32 %v1126, %v1200
        %v1202 = vpop.f32.mrb[0].mxu0
        %1203 = vdwg.mxu0
        %s1204 = scalar_lea.vmem %s196, 16 [#allocation6]
        %v1205 = vld [vmem:[%s1204] sm:$0xff]
        %v1207 = vsel %vm225, %v1205, 0
        %1209 = vmatprep.subr.mxu0 0.0
        %v1210 = vand.u32 %v220, 4294901760
        %1211 = vmatpush1.msra.mxu0 %v1210
        %1212 = vmatprep.subr.mxu0 0.0
        %v1213 = vand.u32 %v221, 4294901760
        %1214 = vmatpush1.msra.mxu0 %v1213
        %1215 = vmatprep.subr.mxu0 0.0
        %v1216 = vand.u32 %v222, 4294901760
        %1217 = vmatpush1.msra.mxu0 %v1216
        %1218 = vmatprep.subr.mxu0 0.0
        %v1219 = vand.u32 %v223, 4294901760
        %1220 = vmatpush1.msra.mxu0 %v1219
        %1221 = vmatprep.subr.mxu0 0.0
        %1222 = vmatpush1.msra.mxu0 0.0
        %1223 = vmatprep.subr.mxu0 0.0
        %1224 = vmatpush1.msra.mxu0 0.0
        %1225 = vmatprep.subr.mxu0 0.0
        %1226 = vmatpush1.msra.mxu0 0.0
        %1227 = vmatprep.subr.mxu0 0.0
        %1228 = vmatpush1.msra.mxu0 0.0
        %1229 = vmatprep.subr.mxu0 0.0
        %1230 = vmatpush1.msra.mxu0 0.0
        %1231 = vmatprep.subr.mxu0 0.0
        %1232 = vmatpush1.msra.mxu0 0.0
        %1233 = vmatprep.subr.mxu0 0.0
        %1234 = vmatpush1.msra.mxu0 0.0
        %1235 = vmatprep.subr.mxu0 0.0
        %1236 = vmatpush1.msra.mxu0 0.0
        %1237 = vmatprep.subr.mxu0 0.0
        %1238 = vmatpush1.msra.mxu0 0.0
        %1239 = vmatprep.subr.mxu0 0.0
        %1240 = vmatpush1.msra.mxu0 0.0
        %1241 = vmatprep.subr.mxu0 0.0
        %1242 = vmatpush1.msra.mxu0 0.0
        %1243 = vmatprep.subr.mxu0 0.0
        %1244 = vmatpush1.msra.mxu0 0.0
        %1245 = vmatprep.subr.mxu0 0.0
        %1246 = vmatpush1.msra.mxu0 0.0
        %1247 = vmatprep.subr.mxu0 0.0
        %1248 = vmatpush1.msra.mxu0 0.0
        %1249 = vmatprep.subr.mxu0 0.0
        %1250 = vmatpush1.msra.mxu0 0.0
        %1251 = vmatprep.subr.mxu0 0.0
        %1252 = vmatpush1.msra.mxu0 0.0
        %1253 = vmatprep.subr.mxu0 0.0
        %1254 = vmatpush1.msra.mxu0 0.0
        %1255 = vmatprep.subr.mxu0 0.0
        %1256 = vmatpush1.msra.mxu0 0.0
        %1257 = vmatprep.subr.mxu0 0.0
        %1258 = vmatpush1.msra.mxu0 0.0
        %1259 = vmatprep.subr.mxu0 0.0
        %1260 = vmatpush1.msra.mxu0 0.0
        %1261 = vmatprep.subr.mxu0 0.0
        %1262 = vmatpush1.msra.mxu0 0.0
        %1263 = vmatprep.subr.mxu0 0.0
        %1264 = vmatpush1.msra.mxu0 0.0
        %1265 = vmatprep.subr.mxu0 0.0
        %1266 = vmatpush1.msra.mxu0 0.0
        %1267 = vmatprep.subr.mxu0 0.0
        %1268 = vmatpush1.msra.mxu0 0.0
        %1269 = vmatprep.subr.mxu0 0.0
        %1270 = vmatpush1.msra.mxu0 0.0
        %1271 = vmatprep.subr.mxu0 0.0
        %1272 = vmatpush1.msra.mxu0 0.0
        %1273 = vmatprep.subr.mxu0 0.0
        %1274 = vmatpush1.msra.mxu0 0.0
        %1275 = vmatprep.subr.mxu0 0.0
        %1276 = vmatpush1.msra.mxu0 0.0
        %1277 = vmatprep.mubr.f32.mxu0 0.0
        %v1278 = vand.u32 %v1207, 4294901760
        %v1279 = vsub.f32 %v1207, %v1278
        %v1280 = vand.u32 %v1279, 4294901760
        %v1281 = vsub.f32 %v1279, %v1280
        %v1282 = vand.u32 %v1281, 4294901760
        %1283 = vmatmul.mubr.f32.gmra.mrb[0].mxu0 %v1282
        %v1284 = vpop.f32.mrb[0].mxu0
        %v1285 = vadd.f32 0.0, %v1284
        %v1286 = vpop.f32.mrb[0].mxu0
        %1287 = vdwg.mxu0
        %1288 = vmatprep.subr.mxu0 0.0
        %v1289 = vand.u32 %v220, 4294901760
        %v1290 = vsub.f32 %v220, %v1289
        %v1291 = vand.u32 %v1290, 4294901760
        %v1292 = vsub.f32 %v1290, %v1291
        %v1293 = vand.u32 %v1292, 4294901760
        %1294 = vmatpush1.msra.mxu0 %v1293
        %1295 = vmatprep.subr.mxu0 0.0
        %v1296 = vand.u32 %v221, 4294901760
        %v1297 = vsub.f32 %v221, %v1296
        %v1298 = vand.u32 %v1297, 4294901760
        %v1299 = vsub.f32 %v1297, %v1298
        %v1300 = vand.u32 %v1299, 4294901760
        %1301 = vmatpush1.msra.mxu0 %v1300
        %1302 = vmatprep.subr.mxu0 0.0
        %v1303 = vand.u32 %v222, 4294901760
        %v1304 = vsub.f32 %v222, %v1303
        %v1305 = vand.u32 %v1304, 4294901760
        %v1306 = vsub.f32 %v1304, %v1305
        %v1307 = vand.u32 %v1306, 4294901760
        %1308 = vmatpush1.msra.mxu0 %v1307
        %1309 = vmatprep.subr.mxu0 0.0
        %v1310 = vand.u32 %v223, 4294901760
        %v1311 = vsub.f32 %v223, %v1310
        %v1312 = vand.u32 %v1311, 4294901760
        %v1313 = vsub.f32 %v1311, %v1312
        %v1314 = vand.u32 %v1313, 4294901760
        %1315 = vmatpush1.msra.mxu0 %v1314
        %1316 = vmatprep.subr.mxu0 0.0
        %1317 = vmatpush1.msra.mxu0 0.0
        %1318 = vmatprep.subr.mxu0 0.0
        %1319 = vmatpush1.msra.mxu0 0.0
        %1320 = vmatprep.subr.mxu0 0.0
        %1321 = vmatpush1.msra.mxu0 0.0
        %1322 = vmatprep.subr.mxu0 0.0
        %1323 = vmatpush1.msra.mxu0 0.0
        %1324 = vmatprep.subr.mxu0 0.0
        %1325 = vmatpush1.msra.mxu0 0.0
        %1326 = vmatprep.subr.mxu0 0.0
        %1327 = vmatpush1.msra.mxu0 0.0
        %1328 = vmatprep.subr.mxu0 0.0
        %1329 = vmatpush1.msra.mxu0 0.0
        %1330 = vmatprep.subr.mxu0 0.0
        %1331 = vmatpush1.msra.mxu0 0.0
        %1332 = vmatprep.subr.mxu0 0.0
        %1333 = vmatpush1.msra.mxu0 0.0
        %1334 = vmatprep.subr.mxu0 0.0
        %1335 = vmatpush1.msra.mxu0 0.0
        %1336 = vmatprep.subr.mxu0 0.0
        %1337 = vmatpush1.msra.mxu0 0.0
        %1338 = vmatprep.subr.mxu0 0.0
        %1339 = vmatpush1.msra.mxu0 0.0
        %1340 = vmatprep.subr.mxu0 0.0
        %1341 = vmatpush1.msra.mxu0 0.0
        %1342 = vmatprep.subr.mxu0 0.0
        %1343 = vmatpush1.msra.mxu0 0.0
        %1344 = vmatprep.subr.mxu0 0.0
        %1345 = vmatpush1.msra.mxu0 0.0
        %1346 = vmatprep.subr.mxu0 0.0
        %1347 = vmatpush1.msra.mxu0 0.0
        %1348 = vmatprep.subr.mxu0 0.0
        %1349 = vmatpush1.msra.mxu0 0.0
        %1350 = vmatprep.subr.mxu0 0.0
        %1351 = vmatpush1.msra.mxu0 0.0
        %1352 = vmatprep.subr.mxu0 0.0
        %1353 = vmatpush1.msra.mxu0 0.0
        %1354 = vmatprep.subr.mxu0 0.0
        %1355 = vmatpush1.msra.mxu0 0.0
        %1356 = vmatprep.subr.mxu0 0.0
        %1357 = vmatpush1.msra.mxu0 0.0
        %1358 = vmatprep.subr.mxu0 0.0
        %1359 = vmatpush1.msra.mxu0 0.0
        %1360 = vmatprep.subr.mxu0 0.0
        %1361 = vmatpush1.msra.mxu0 0.0
        %1362 = vmatprep.subr.mxu0 0.0
        %1363 = vmatpush1.msra.mxu0 0.0
        %1364 = vmatprep.subr.mxu0 0.0
        %1365 = vmatpush1.msra.mxu0 0.0
        %1366 = vmatprep.subr.mxu0 0.0
        %1367 = vmatpush1.msra.mxu0 0.0
        %1368 = vmatprep.subr.mxu0 0.0
        %1369 = vmatpush1.msra.mxu0 0.0
        %1370 = vmatprep.subr.mxu0 0.0
        %1371 = vmatpush1.msra.mxu0 0.0
        %1372 = vmatprep.mubr.f32.mxu0 0.0
        %v1373 = vand.u32 %v1207, 4294901760
        %1374 = vmatmul.mubr.f32.gmra.mrb[0].mxu0 %v1373
        %v1375 = vpop.f32.mrb[0].mxu0
        %v1376 = vadd.f32 %v1285, %v1375
        %v1377 = vpop.f32.mrb[0].mxu0
        %1378 = vdwg.mxu0
        %1379 = vmatprep.subr.mxu0 0.0
        %v1380 = vand.u32 %v220, 4294901760
        %v1381 = vsub.f32 %v220, %v1380
        %1382 = vmatpush1.msra.mxu0 %v1381
        %1383 = vmatprep.subr.mxu0 0.0
        %v1384 = vand.u32 %v221, 4294901760
        %v1385 = vsub.f32 %v221, %v1384
        %1386 = vmatpush1.msra.mxu0 %v1385
        %1387 = vmatprep.subr.mxu0 0.0
        %v1388 = vand.u32 %v222, 4294901760
        %v1389 = vsub.f32 %v222, %v1388
        %1390 = vmatpush1.msra.mxu0 %v1389
        %1391 = vmatprep.subr.mxu0 0.0
        %v1392 = vand.u32 %v223, 4294901760
        %v1393 = vsub.f32 %v223, %v1392
        %1394 = vmatpush1.msra.mxu0 %v1393
        %1395 = vmatprep.subr.mxu0 0.0
        %1396 = vmatpush1.msra.mxu0 0.0
        %1397 = vmatprep.subr.mxu0 0.0
        %1398 = vmatpush1.msra.mxu0 0.0
        %1399 = vmatprep.subr.mxu0 0.0
        %1400 = vmatpush1.msra.mxu0 0.0
        %1401 = vmatprep.subr.mxu0 0.0
        %1402 = vmatpush1.msra.mxu0 0.0
        %1403 = vmatprep.subr.mxu0 0.0
        %1404 = vmatpush1.msra.mxu0 0.0
        %1405 = vmatprep.subr.mxu0 0.0
        %1406 = vmatpush1.msra.mxu0 0.0
        %1407 = vmatprep.subr.mxu0 0.0
        %1408 = vmatpush1.msra.mxu0 0.0
        %1409 = vmatprep.subr.mxu0 0.0
        %1410 = vmatpush1.msra.mxu0 0.0
        %1411 = vmatprep.subr.mxu0 0.0
        %1412 = vmatpush1.msra.mxu0 0.0
        %1413 = vmatprep.subr.mxu0 0.0
        %1414 = vmatpush1.msra.mxu0 0.0
        %1415 = vmatprep.subr.mxu0 0.0
        %1416 = vmatpush1.msra.mxu0 0.0
        %1417 = vmatprep.subr.mxu0 0.0
        %1418 = vmatpush1.msra.mxu0 0.0
        %1419 = vmatprep.subr.mxu0 0.0
        %1420 = vmatpush1.msra.mxu0 0.0
        %1421 = vmatprep.subr.mxu0 0.0
        %1422 = vmatpush1.msra.mxu0 0.0
        %1423 = vmatprep.subr.mxu0 0.0
        %1424 = vmatpush1.msra.mxu0 0.0
        %1425 = vmatprep.subr.mxu0 0.0
        %1426 = vmatpush1.msra.mxu0 0.0
        %1427 = vmatprep.subr.mxu0 0.0
        %1428 = vmatpush1.msra.mxu0 0.0
        %1429 = vmatprep.subr.mxu0 0.0
        %1430 = vmatpush1.msra.mxu0 0.0
        %1431 = vmatprep.subr.mxu0 0.0
        %1432 = vmatpush1.msra.mxu0 0.0
        %1433 = vmatprep.subr.mxu0 0.0
        %1434 = vmatpush1.msra.mxu0 0.0
        %1435 = vmatprep.subr.mxu0 0.0
        %1436 = vmatpush1.msra.mxu0 0.0
        %1437 = vmatprep.subr.mxu0 0.0
        %1438 = vmatpush1.msra.mxu0 0.0
        %1439 = vmatprep.subr.mxu0 0.0
        %1440 = vmatpush1.msra.mxu0 0.0
        %1441 = vmatprep.subr.mxu0 0.0
        %1442 = vmatpush1.msra.mxu0 0.0
        %1443 = vmatprep.subr.mxu0 0.0
        %1444 = vmatpush1.msra.mxu0 0.0
        %1445 = vmatprep.subr.mxu0 0.0
        %1446 = vmatpush1.msra.mxu0 0.0
        %1447 = vmatprep.subr.mxu0 0.0
        %1448 = vmatpush1.msra.mxu0 0.0
        %1449 = vmatprep.subr.mxu0 0.0
        %1450 = vmatpush1.msra.mxu0 0.0
        %1451 = vmatprep.mubr.f32.mxu0 0.0
        %v1452 = vand.u32 %v1207, 4294901760
        %v1453 = vsub.f32 %v1207, %v1452
        %1454 = vmatmul.mubr.f32.gmra.mrb[0].mxu0 %v1453
        %v1455 = vpop.f32.mrb[0].mxu0
        %v1456 = vadd.f32 %v1376, %v1455
        %v1457 = vpop.f32.mrb[0].mxu0
        %1458 = vdwg.mxu0
        %1459 = vmatprep.subr.mxu0 0.0
        %v1460 = vand.u32 %v220, 4294901760
        %1461 = vmatpush1.msra.mxu0 %v1460
        %1462 = vmatprep.subr.mxu0 0.0
        %v1463 = vand.u32 %v221, 4294901760
        %1464 = vmatpush1.msra.mxu0 %v1463
        %1465 = vmatprep.subr.mxu0 0.0
        %v1466 = vand.u32 %v222, 4294901760
        %1467 = vmatpush1.msra.mxu0 %v1466
        %1468 = vmatprep.subr.mxu0 0.0
        %v1469 = vand.u32 %v223, 4294901760
        %1470 = vmatpush1.msra.mxu0 %v1469
        %1471 = vmatprep.subr.mxu0 0.0
        %1472 = vmatpush1.msra.mxu0 0.0
        %1473 = vmatprep.subr.mxu0 0.0
        %1474 = vmatpush1.msra.mxu0 0.0
        %1475 = vmatprep.subr.mxu0 0.0
        %1476 = vmatpush1.msra.mxu0 0.0
        %1477 = vmatprep.subr.mxu0 0.0
        %1478 = vmatpush1.msra.mxu0 0.0
        %1479 = vmatprep.subr.mxu0 0.0
        %1480 = vmatpush1.msra.mxu0 0.0
        %1481 = vmatprep.subr.mxu0 0.0
        %1482 = vmatpush1.msra.mxu0 0.0
        %1483 = vmatprep.subr.mxu0 0.0
        %1484 = vmatpush1.msra.mxu0 0.0
        %1485 = vmatprep.subr.mxu0 0.0
        %1486 = vmatpush1.msra.mxu0 0.0
        %1487 = vmatprep.subr.mxu0 0.0
        %1488 = vmatpush1.msra.mxu0 0.0
        %1489 = vmatprep.subr.mxu0 0.0
        %1490 = vmatpush1.msra.mxu0 0.0
        %1491 = vmatprep.subr.mxu0 0.0
        %1492 = vmatpush1.msra.mxu0 0.0
        %1493 = vmatprep.subr.mxu0 0.0
        %1494 = vmatpush1.msra.mxu0 0.0
        %1495 = vmatprep.subr.mxu0 0.0
        %1496 = vmatpush1.msra.mxu0 0.0
        %1497 = vmatprep.subr.mxu0 0.0
        %1498 = vmatpush1.msra.mxu0 0.0
        %1499 = vmatprep.subr.mxu0 0.0
        %1500 = vmatpush1.msra.mxu0 0.0
        %1501 = vmatprep.subr.mxu0 0.0
        %1502 = vmatpush1.msra.mxu0 0.0
        %1503 = vmatprep.subr.mxu0 0.0
        %1504 = vmatpush1.msra.mxu0 0.0
        %1505 = vmatprep.subr.mxu0 0.0
        %1506 = vmatpush1.msra.mxu0 0.0
        %1507 = vmatprep.subr.mxu0 0.0
        %1508 = vmatpush1.msra.mxu0 0.0
        %1509 = vmatprep.subr.mxu0 0.0
        %1510 = vmatpush1.msra.mxu0 0.0
        %1511 = vmatprep.subr.mxu0 0.0
        %1512 = vmatpush1.msra.mxu0 0.0
        %1513 = vmatprep.subr.mxu0 0.0
        %1514 = vmatpush1.msra.mxu0 0.0
        %1515 = vmatprep.subr.mxu0 0.0
        %1516 = vmatpush1.msra.mxu0 0.0
        %1517 = vmatprep.subr.mxu0 0.0
        %1518 = vmatpush1.msra.mxu0 0.0
        %1519 = vmatprep.subr.mxu0 0.0
        %1520 = vmatpush1.msra.mxu0 0.0
        %1521 = vmatprep.subr.mxu0 0.0
        %1522 = vmatpush1.msra.mxu0 0.0
        %1523 = vmatprep.subr.mxu0 0.0
        %1524 = vmatpush1.msra.mxu0 0.0
        %1525 = vmatprep.subr.mxu0 0.0
        %1526 = vmatpush1.msra.mxu0 0.0
        %1527 = vmatprep.mubr.f32.mxu0 0.0
        %v1528 = vand.u32 %v1207, 4294901760
        %v1529 = vsub.f32 %v1207, %v1528
        %v1530 = vand.u32 %v1529, 4294901760
        %1531 = vmatmul.mubr.f32.gmra.mrb[0].mxu0 %v1530
        %v1532 = vpop.f32.mrb[0].mxu0
        %v1533 = vadd.f32 %v1456, %v1532
        %v1534 = vpop.f32.mrb[0].mxu0
        %1535 = vdwg.mxu0
        %1536 = vmatprep.subr.mxu0 0.0
        %v1537 = vand.u32 %v220, 4294901760
        %v1538 = vsub.f32 %v220, %v1537
        %v1539 = vand.u32 %v1538, 4294901760
        %1540 = vmatpush1.msra.mxu0 %v1539
        %1541 = vmatprep.subr.mxu0 0.0
        %v1542 = vand.u32 %v221, 4294901760
        %v1543 = vsub.f32 %v221, %v1542
        %v1544 = vand.u32 %v1543, 4294901760
        %1545 = vmatpush1.msra.mxu0 %v1544
        %1546 = vmatprep.subr.mxu0 0.0
        %v1547 = vand.u32 %v222, 4294901760
        %v1548 = vsub.f32 %v222, %v1547
        %v1549 = vand.u32 %v1548, 4294901760
        %1550 = vmatpush1.msra.mxu0 %v1549
        %1551 = vmatprep.subr.mxu0 0.0
        %v1552 = vand.u32 %v223, 4294901760
        %v1553 = vsub.f32 %v223, %v1552
        %v1554 = vand.u32 %v1553, 4294901760
        %1555 = vmatpush1.msra.mxu0 %v1554
        %1556 = vmatprep.subr.mxu0 0.0
        %1557 = vmatpush1.msra.mxu0 0.0
        %1558 = vmatprep.subr.mxu0 0.0
        %1559 = vmatpush1.msra.mxu0 0.0
        %1560 = vmatprep.subr.mxu0 0.0
        %1561 = vmatpush1.msra.mxu0 0.0
        %1562 = vmatprep.subr.mxu0 0.0
        %1563 = vmatpush1.msra.mxu0 0.0
        %1564 = vmatprep.subr.mxu0 0.0
        %1565 = vmatpush1.msra.mxu0 0.0
        %1566 = vmatprep.subr.mxu0 0.0
        %1567 = vmatpush1.msra.mxu0 0.0
        %1568 = vmatprep.subr.mxu0 0.0
        %1569 = vmatpush1.msra.mxu0 0.0
        %1570 = vmatprep.subr.mxu0 0.0
        %1571 = vmatpush1.msra.mxu0 0.0
        %1572 = vmatprep.subr.mxu0 0.0
        %1573 = vmatpush1.msra.mxu0 0.0
        %1574 = vmatprep.subr.mxu0 0.0
        %1575 = vmatpush1.msra.mxu0 0.0
        %1576 = vmatprep.subr.mxu0 0.0
        %1577 = vmatpush1.msra.mxu0 0.0
        %1578 = vmatprep.subr.mxu0 0.0
        %1579 = vmatpush1.msra.mxu0 0.0
        %1580 = vmatprep.subr.mxu0 0.0
        %1581 = vmatpush1.msra.mxu0 0.0
        %1582 = vmatprep.subr.mxu0 0.0
        %1583 = vmatpush1.msra.mxu0 0.0
        %1584 = vmatprep.subr.mxu0 0.0
        %1585 = vmatpush1.msra.mxu0 0.0
        %1586 = vmatprep.subr.mxu0 0.0
        %1587 = vmatpush1.msra.mxu0 0.0
        %1588 = vmatprep.subr.mxu0 0.0
        %1589 = vmatpush1.msra.mxu0 0.0
        %1590 = vmatprep.subr.mxu0 0.0
        %1591 = vmatpush1.msra.mxu0 0.0
        %1592 = vmatprep.subr.mxu0 0.0
        %1593 = vmatpush1.msra.mxu0 0.0
        %1594 = vmatprep.subr.mxu0 0.0
        %1595 = vmatpush1.msra.mxu0 0.0
        %1596 = vmatprep.subr.mxu0 0.0
        %1597 = vmatpush1.msra.mxu0 0.0
        %1598 = vmatprep.subr.mxu0 0.0
        %1599 = vmatpush1.msra.mxu0 0.0
        %1600 = vmatprep.subr.mxu0 0.0
        %1601 = vmatpush1.msra.mxu0 0.0
        %1602 = vmatprep.subr.mxu0 0.0
        %1603 = vmatpush1.msra.mxu0 0.0
        %1604 = vmatprep.subr.mxu0 0.0
        %1605 = vmatpush1.msra.mxu0 0.0
        %1606 = vmatprep.subr.mxu0 0.0
        %1607 = vmatpush1.msra.mxu0 0.0
        %1608 = vmatprep.subr.mxu0 0.0
        %1609 = vmatpush1.msra.mxu0 0.0
        %1610 = vmatprep.subr.mxu0 0.0
        %1611 = vmatpush1.msra.mxu0 0.0
        %1612 = vmatprep.mubr.f32.mxu0 0.0
        %v1613 = vand.u32 %v1207, 4294901760
        %1614 = vmatmul.mubr.f32.gmra.mrb[0].mxu0 %v1613
        %v1615 = vpop.f32.mrb[0].mxu0
        %v1616 = vadd.f32 %v1533, %v1615
        %v1617 = vpop.f32.mrb[0].mxu0
        %1618 = vdwg.mxu0
        %1619 = vmatprep.subr.mxu0 0.0
        %v1620 = vand.u32 %v220, 4294901760
        %1621 = vmatpush1.msra.mxu0 %v1620
        %1622 = vmatprep.subr.mxu0 0.0
        %v1623 = vand.u32 %v221, 4294901760
        %1624 = vmatpush1.msra.mxu0 %v1623
        %1625 = vmatprep.subr.mxu0 0.0
        %v1626 = vand.u32 %v222, 4294901760
        %1627 = vmatpush1.msra.mxu0 %v1626
        %1628 = vmatprep.subr.mxu0 0.0
        %v1629 = vand.u32 %v223, 4294901760
        %1630 = vmatpush1.msra.mxu0 %v1629
        %1631 = vmatprep.subr.mxu0 0.0
        %1632 = vmatpush1.msra.mxu0 0.0
        %1633 = vmatprep.subr.mxu0 0.0
        %1634 = vmatpush1.msra.mxu0 0.0
        %1635 = vmatprep.subr.mxu0 0.0
        %1636 = vmatpush1.msra.mxu0 0.0
        %1637 = vmatprep.subr.mxu0 0.0
        %1638 = vmatpush1.msra.mxu0 0.0
        %1639 = vmatprep.subr.mxu0 0.0
        %1640 = vmatpush1.msra.mxu0 0.0
        %1641 = vmatprep.subr.mxu0 0.0
        %1642 = vmatpush1.msra.mxu0 0.0
        %1643 = vmatprep.subr.mxu0 0.0
        %1644 = vmatpush1.msra.mxu0 0.0
        %1645 = vmatprep.subr.mxu0 0.0
        %1646 = vmatpush1.msra.mxu0 0.0
        %1647 = vmatprep.subr.mxu0 0.0
        %1648 = vmatpush1.msra.mxu0 0.0
        %1649 = vmatprep.subr.mxu0 0.0
        %1650 = vmatpush1.msra.mxu0 0.0
        %1651 = vmatprep.subr.mxu0 0.0
        %1652 = vmatpush1.msra.mxu0 0.0
        %1653 = vmatprep.subr.mxu0 0.0
        %1654 = vmatpush1.msra.mxu0 0.0
        %1655 = vmatprep.subr.mxu0 0.0
        %1656 = vmatpush1.msra.mxu0 0.0
        %1657 = vmatprep.subr.mxu0 0.0
        %1658 = vmatpush1.msra.mxu0 0.0
        %1659 = vmatprep.subr.mxu0 0.0
        %1660 = vmatpush1.msra.mxu0 0.0
        %1661 = vmatprep.subr.mxu0 0.0
        %1662 = vmatpush1.msra.mxu0 0.0
        %1663 = vmatprep.subr.mxu0 0.0
        %1664 = vmatpush1.msra.mxu0 0.0
        %1665 = vmatprep.subr.mxu0 0.0
        %1666 = vmatpush1.msra.mxu0 0.0
        %1667 = vmatprep.subr.mxu0 0.0
        %1668 = vmatpush1.msra.mxu0 0.0
        %1669 = vmatprep.subr.mxu0 0.0
        %1670 = vmatpush1.msra.mxu0 0.0
        %1671 = vmatprep.subr.mxu0 0.0
        %1672 = vmatpush1.msra.mxu0 0.0
        %1673 = vmatprep.subr.mxu0 0.0
        %1674 = vmatpush1.msra.mxu0 0.0
        %1675 = vmatprep.subr.mxu0 0.0
        %1676 = vmatpush1.msra.mxu0 0.0
        %1677 = vmatprep.subr.mxu0 0.0
        %1678 = vmatpush1.msra.mxu0 0.0
        %1679 = vmatprep.subr.mxu0 0.0
        %1680 = vmatpush1.msra.mxu0 0.0
        %1681 = vmatprep.subr.mxu0 0.0
        %1682 = vmatpush1.msra.mxu0 0.0
        %1683 = vmatprep.subr.mxu0 0.0
        %1684 = vmatpush1.msra.mxu0 0.0
        %1685 = vmatprep.subr.mxu0 0.0
        %1686 = vmatpush1.msra.mxu0 0.0
        %1687 = vmatprep.mubr.f32.mxu0 0.0
        %v1688 = vand.u32 %v1207, 4294901760
        %1689 = vmatmul.mubr.f32.gmra.mrb[0].mxu0 %v1688
        %v1690 = vpop.f32.mrb[0].mxu0
        %v1691 = vadd.f32 %v1616, %v1690
        %v1692 = vpop.f32.mrb[0].mxu0
        %1693 = vdwg.mxu0
        %s1694 = scalar_lea.vmem %s196, 24 [#allocation6]
        %v1695 = vld [vmem:[%s1694] sm:$0xff]
        %v1697 = vsel %vm225, %v1695, 0
        %1699 = vmatprep.subr.mxu0 0.0
        %v1700 = vand.u32 %v220, 4294901760
        %1701 = vmatpush1.msra.mxu0 %v1700
        %1702 = vmatprep.subr.mxu0 0.0
        %v1703 = vand.u32 %v221, 4294901760
        %1704 = vmatpush1.msra.mxu0 %v1703
        %1705 = vmatprep.subr.mxu0 0.0
        %v1706 = vand.u32 %v222, 4294901760
        %1707 = vmatpush1.msra.mxu0 %v1706
        %1708 = vmatprep.subr.mxu0 0.0
        %v1709 = vand.u32 %v223, 4294901760
        %1710 = vmatpush1.msra.mxu0 %v1709
        %1711 = vmatprep.subr.mxu0 0.0
        %1712 = vmatpush1.msra.mxu0 0.0
        %1713 = vmatprep.subr.mxu0 0.0
        %1714 = vmatpush1.msra.mxu0 0.0
        %1715 = vmatprep.subr.mxu0 0.0
        %1716 = vmatpush1.msra.mxu0 0.0
        %1717 = vmatprep.subr.mxu0 0.0
        %1718 = vmatpush1.msra.mxu0 0.0
        %1719 = vmatprep.subr.mxu0 0.0
        %1720 = vmatpush1.msra.mxu0 0.0
        %1721 = vmatprep.subr.mxu0 0.0
        %1722 = vmatpush1.msra.mxu0 0.0
        %1723 = vmatprep.subr.mxu0 0.0
        %1724 = vmatpush1.msra.mxu0 0.0
        %1725 = vmatprep.subr.mxu0 0.0
        %1726 = vmatpush1.msra.mxu0 0.0
        %1727 = vmatprep.subr.mxu0 0.0
        %1728 = vmatpush1.msra.mxu0 0.0
        %1729 = vmatprep.subr.mxu0 0.0
        %1730 = vmatpush1.msra.mxu0 0.0
        %1731 = vmatprep.subr.mxu0 0.0
        %1732 = vmatpush1.msra.mxu0 0.0
        %1733 = vmatprep.subr.mxu0 0.0
        %1734 = vmatpush1.msra.mxu0 0.0
        %1735 = vmatprep.subr.mxu0 0.0
        %1736 = vmatpush1.msra.mxu0 0.0
        %1737 = vmatprep.subr.mxu0 0.0
        %1738 = vmatpush1.msra.mxu0 0.0
        %1739 = vmatprep.subr.mxu0 0.0
        %1740 = vmatpush1.msra.mxu0 0.0
        %1741 = vmatprep.subr.mxu0 0.0
        %1742 = vmatpush1.msra.mxu0 0.0
        %1743 = vmatprep.subr.mxu0 0.0
        %1744 = vmatpush1.msra.mxu0 0.0
        %1745 = vmatprep.subr.mxu0 0.0
        %1746 = vmatpush1.msra.mxu0 0.0
        %1747 = vmatprep.subr.mxu0 0.0
        %1748 = vmatpush1.msra.mxu0 0.0
        %1749 = vmatprep.subr.mxu0 0.0
        %1750 = vmatpush1.msra.mxu0 0.0
        %1751 = vmatprep.subr.mxu0 0.0
        %1752 = vmatpush1.msra.mxu0 0.0
        %1753 = vmatprep.subr.mxu0 0.0
        %1754 = vmatpush1.msra.mxu0 0.0
        %1755 = vmatprep.subr.mxu0 0.0
        %1756 = vmatpush1.msra.mxu0 0.0
        %1757 = vmatprep.subr.mxu0 0.0
        %1758 = vmatpush1.msra.mxu0 0.0
        %1759 = vmatprep.subr.mxu0 0.0
        %1760 = vmatpush1.msra.mxu0 0.0
        %1761 = vmatprep.subr.mxu0 0.0
        %1762 = vmatpush1.msra.mxu0 0.0
        %1763 = vmatprep.subr.mxu0 0.0
        %1764 = vmatpush1.msra.mxu0 0.0
        %1765 = vmatprep.subr.mxu0 0.0
        %1766 = vmatpush1.msra.mxu0 0.0
        %1767 = vmatprep.mubr.f32.mxu0 0.0
        %v1768 = vand.u32 %v1697, 4294901760
        %v1769 = vsub.f32 %v1697, %v1768
        %v1770 = vand.u32 %v1769, 4294901760
        %v1771 = vsub.f32 %v1769, %v1770
        %v1772 = vand.u32 %v1771, 4294901760
        %1773 = vmatmul.mubr.f32.gmra.mrb[0].mxu0 %v1772
        %v1774 = vpop.f32.mrb[0].mxu0
        %v1775 = vadd.f32 0.0, %v1774
        %v1776 = vpop.f32.mrb[0].mxu0
        %1777 = vdwg.mxu0
        %1778 = vmatprep.subr.mxu0 0.0
        %v1779 = vand.u32 %v220, 4294901760
        %v1780 = vsub.f32 %v220, %v1779
        %v1781 = vand.u32 %v1780, 4294901760
        %v1782 = vsub.f32 %v1780, %v1781
        %v1783 = vand.u32 %v1782, 4294901760
        %1784 = vmatpush1.msra.mxu0 %v1783
        %1785 = vmatprep.subr.mxu0 0.0
        %v1786 = vand.u32 %v221, 4294901760
        %v1787 = vsub.f32 %v221, %v1786
        %v1788 = vand.u32 %v1787, 4294901760
        %v1789 = vsub.f32 %v1787, %v1788
        %v1790 = vand.u32 %v1789, 4294901760
        %1791 = vmatpush1.msra.mxu0 %v1790
        %1792 = vmatprep.subr.mxu0 0.0
        %v1793 = vand.u32 %v222, 4294901760
        %v1794 = vsub.f32 %v222, %v1793
        %v1795 = vand.u32 %v1794, 4294901760
        %v1796 = vsub.f32 %v1794, %v1795
        %v1797 = vand.u32 %v1796, 4294901760
        %1798 = vmatpush1.msra.mxu0 %v1797
        %1799 = vmatprep.subr.mxu0 0.0
        %v1800 = vand.u32 %v223, 4294901760
        %v1801 = vsub.f32 %v223, %v1800
        %v1802 = vand.u32 %v1801, 4294901760
        %v1803 = vsub.f32 %v1801, %v1802
        %v1804 = vand.u32 %v1803, 4294901760
        %1805 = vmatpush1.msra.mxu0 %v1804
        %1806 = vmatprep.subr.mxu0 0.0
        %1807 = vmatpush1.msra.mxu0 0.0
        %1808 = vmatprep.subr.mxu0 0.0
        %1809 = vmatpush1.msra.mxu0 0.0
        %1810 = vmatprep.subr.mxu0 0.0
        %1811 = vmatpush1.msra.mxu0 0.0
        %1812 = vmatprep.subr.mxu0 0.0
        %1813 = vmatpush1.msra.mxu0 0.0
        %1814 = vmatprep.subr.mxu0 0.0
        %1815 = vmatpush1.msra.mxu0 0.0
        %1816 = vmatprep.subr.mxu0 0.0
        %1817 = vmatpush1.msra.mxu0 0.0
        %1818 = vmatprep.subr.mxu0 0.0
        %1819 = vmatpush1.msra.mxu0 0.0
        %1820 = vmatprep.subr.mxu0 0.0
        %1821 = vmatpush1.msra.mxu0 0.0
        %1822 = vmatprep.subr.mxu0 0.0
        %1823 = vmatpush1.msra.mxu0 0.0
        %1824 = vmatprep.subr.mxu0 0.0
        %1825 = vmatpush1.msra.mxu0 0.0
        %1826 = vmatprep.subr.mxu0 0.0
        %1827 = vmatpush1.msra.mxu0 0.0
        %1828 = vmatprep.subr.mxu0 0.0
        %1829 = vmatpush1.msra.mxu0 0.0
        %1830 = vmatprep.subr.mxu0 0.0
        %1831 = vmatpush1.msra.mxu0 0.0
        %1832 = vmatprep.subr.mxu0 0.0
        %1833 = vmatpush1.msra.mxu0 0.0
        %1834 = vmatprep.subr.mxu0 0.0
        %1835 = vmatpush1.msra.mxu0 0.0
        %1836 = vmatprep.subr.mxu0 0.0
        %1837 = vmatpush1.msra.mxu0 0.0
        %1838 = vmatprep.subr.mxu0 0.0
        %1839 = vmatpush1.msra.mxu0 0.0
        %1840 = vmatprep.subr.mxu0 0.0
        %1841 = vmatpush1.msra.mxu0 0.0
        %1842 = vmatprep.subr.mxu0 0.0
        %1843 = vmatpush1.msra.mxu0 0.0
        %1844 = vmatprep.subr.mxu0 0.0
        %1845 = vmatpush1.msra.mxu0 0.0
        %1846 = vmatprep.subr.mxu0 0.0
        %1847 = vmatpush1.msra.mxu0 0.0
        %1848 = vmatprep.subr.mxu0 0.0
        %1849 = vmatpush1.msra.mxu0 0.0
        %1850 = vmatprep.subr.mxu0 0.0
        %1851 = vmatpush1.msra.mxu0 0.0
        %1852 = vmatprep.subr.mxu0 0.0
        %1853 = vmatpush1.msra.mxu0 0.0
        %1854 = vmatprep.subr.mxu0 0.0
        %1855 = vmatpush1.msra.mxu0 0.0
        %1856 = vmatprep.subr.mxu0 0.0
        %1857 = vmatpush1.msra.mxu0 0.0
        %1858 = vmatprep.subr.mxu0 0.0
        %1859 = vmatpush1.msra.mxu0 0.0
        %1860 = vmatprep.subr.mxu0 0.0
        %1861 = vmatpush1.msra.mxu0 0.0
        %1862 = vmatprep.mubr.f32.mxu0 0.0
        %v1863 = vand.u32 %v1697, 4294901760
        %1864 = vmatmul.mubr.f32.gmra.mrb[0].mxu0 %v1863
        %v1865 = vpop.f32.mrb[0].mxu0
        %v1866 = vadd.f32 %v1775, %v1865
        %v1867 = vpop.f32.mrb[0].mxu0
        %1868 = vdwg.mxu0
        %1869 = vmatprep.subr.mxu0 0.0
        %v1870 = vand.u32 %v220, 4294901760
        %v1871 = vsub.f32 %v220, %v1870
        %1872 = vmatpush1.msra.mxu0 %v1871
        %1873 = vmatprep.subr.mxu0 0.0
        %v1874 = vand.u32 %v221, 4294901760
        %v1875 = vsub.f32 %v221, %v1874
        %1876 = vmatpush1.msra.mxu0 %v1875
        %1877 = vmatprep.subr.mxu0 0.0
        %v1878 = vand.u32 %v222, 4294901760
        %v1879 = vsub.f32 %v222, %v1878
        %1880 = vmatpush1.msra.mxu0 %v1879
        %1881 = vmatprep.subr.mxu0 0.0
        %v1882 = vand.u32 %v223, 4294901760
        %v1883 = vsub.f32 %v223, %v1882
        %1884 = vmatpush1.msra.mxu0 %v1883
        %1885 = vmatprep.subr.mxu0 0.0
        %1886 = vmatpush1.msra.mxu0 0.0
        %1887 = vmatprep.subr.mxu0 0.0
        %1888 = vmatpush1.msra.mxu0 0.0
        %1889 = vmatprep.subr.mxu0 0.0
        %1890 = vmatpush1.msra.mxu0 0.0
        %1891 = vmatprep.subr.mxu0 0.0
        %1892 = vmatpush1.msra.mxu0 0.0
        %1893 = vmatprep.subr.mxu0 0.0
        %1894 = vmatpush1.msra.mxu0 0.0
        %1895 = vmatprep.subr.mxu0 0.0
        %1896 = vmatpush1.msra.mxu0 0.0
        %1897 = vmatprep.subr.mxu0 0.0
        %1898 = vmatpush1.msra.mxu0 0.0
        %1899 = vmatprep.subr.mxu0 0.0
        %1900 = vmatpush1.msra.mxu0 0.0
        %1901 = vmatprep.subr.mxu0 0.0
        %1902 = vmatpush1.msra.mxu0 0.0
        %1903 = vmatprep.subr.mxu0 0.0
        %1904 = vmatpush1.msra.mxu0 0.0
        %1905 = vmatprep.subr.mxu0 0.0
        %1906 = vmatpush1.msra.mxu0 0.0
        %1907 = vmatprep.subr.mxu0 0.0
        %1908 = vmatpush1.msra.mxu0 0.0
        %1909 = vmatprep.subr.mxu0 0.0
        %1910 = vmatpush1.msra.mxu0 0.0
        %1911 = vmatprep.subr.mxu0 0.0
        %1912 = vmatpush1.msra.mxu0 0.0
        %1913 = vmatprep.subr.mxu0 0.0
        %1914 = vmatpush1.msra.mxu0 0.0
        %1915 = vmatprep.subr.mxu0 0.0
        %1916 = vmatpush1.msra.mxu0 0.0
        %1917 = vmatprep.subr.mxu0 0.0
        %1918 = vmatpush1.msra.mxu0 0.0
        %1919 = vmatprep.subr.mxu0 0.0
        %1920 = vmatpush1.msra.mxu0 0.0
        %1921 = vmatprep.subr.mxu0 0.0
        %1922 = vmatpush1.msra.mxu0 0.0
        %1923 = vmatprep.subr.mxu0 0.0
        %1924 = vmatpush1.msra.mxu0 0.0
        %1925 = vmatprep.subr.mxu0 0.0
        %1926 = vmatpush1.msra.mxu0 0.0
        %1927 = vmatprep.subr.mxu0 0.0
        %1928 = vmatpush1.msra.mxu0 0.0
        %1929 = vmatprep.subr.mxu0 0.0
        %1930 = vmatpush1.msra.mxu0 0.0
        %1931 = vmatprep.subr.mxu0 0.0
        %1932 = vmatpush1.msra.mxu0 0.0
        %1933 = vmatprep.subr.mxu0 0.0
        %1934 = vmatpush1.msra.mxu0 0.0
        %1935 = vmatprep.subr.mxu0 0.0
        %1936 = vmatpush1.msra.mxu0 0.0
        %1937 = vmatprep.subr.mxu0 0.0
        %1938 = vmatpush1.msra.mxu0 0.0
        %1939 = vmatprep.subr.mxu0 0.0
        %1940 = vmatpush1.msra.mxu0 0.0
        %1941 = vmatprep.mubr.f32.mxu0 0.0
        %v1942 = vand.u32 %v1697, 4294901760
        %v1943 = vsub.f32 %v1697, %v1942
        %1944 = vmatmul.mubr.f32.gmra.mrb[0].mxu0 %v1943
        %v1945 = vpop.f32.mrb[0].mxu0
        %v1946 = vadd.f32 %v1866, %v1945
        %v1947 = vpop.f32.mrb[0].mxu0
        %1948 = vdwg.mxu0
        %1949 = vmatprep.subr.mxu0 0.0
        %v1950 = vand.u32 %v220, 4294901760
        %1951 = vmatpush1.msra.mxu0 %v1950
        %1952 = vmatprep.subr.mxu0 0.0
        %v1953 = vand.u32 %v221, 4294901760
        %1954 = vmatpush1.msra.mxu0 %v1953
        %1955 = vmatprep.subr.mxu0 0.0
        %v1956 = vand.u32 %v222, 4294901760
        %1957 = vmatpush1.msra.mxu0 %v1956
        %1958 = vmatprep.subr.mxu0 0.0
        %v1959 = vand.u32 %v223, 4294901760
        %1960 = vmatpush1.msra.mxu0 %v1959
        %1961 = vmatprep.subr.mxu0 0.0
        %1962 = vmatpush1.msra.mxu0 0.0
        %1963 = vmatprep.subr.mxu0 0.0
        %1964 = vmatpush1.msra.mxu0 0.0
        %1965 = vmatprep.subr.mxu0 0.0
        %1966 = vmatpush1.msra.mxu0 0.0
        %1967 = vmatprep.subr.mxu0 0.0
        %1968 = vmatpush1.msra.mxu0 0.0
        %1969 = vmatprep.subr.mxu0 0.0
        %1970 = vmatpush1.msra.mxu0 0.0
        %1971 = vmatprep.subr.mxu0 0.0
        %1972 = vmatpush1.msra.mxu0 0.0
        %1973 = vmatprep.subr.mxu0 0.0
        %1974 = vmatpush1.msra.mxu0 0.0
        %1975 = vmatprep.subr.mxu0 0.0
        %1976 = vmatpush1.msra.mxu0 0.0
        %1977 = vmatprep.subr.mxu0 0.0
        %1978 = vmatpush1.msra.mxu0 0.0
        %1979 = vmatprep.subr.mxu0 0.0
        %1980 = vmatpush1.msra.mxu0 0.0
        %1981 = vmatprep.subr.mxu0 0.0
        %1982 = vmatpush1.msra.mxu0 0.0
        %1983 = vmatprep.subr.mxu0 0.0
        %1984 = vmatpush1.msra.mxu0 0.0
        %1985 = vmatprep.subr.mxu0 0.0
        %1986 = vmatpush1.msra.mxu0 0.0
        %1987 = vmatprep.subr.mxu0 0.0
        %1988 = vmatpush1.msra.mxu0 0.0
        %1989 = vmatprep.subr.mxu0 0.0
        %1990 = vmatpush1.msra.mxu0 0.0
        %1991 = vmatprep.subr.mxu0 0.0
        %1992 = vmatpush1.msra.mxu0 0.0
        %1993 = vmatprep.subr.mxu0 0.0
        %1994 = vmatpush1.msra.mxu0 0.0
        %1995 = vmatprep.subr.mxu0 0.0
        %1996 = vmatpush1.msra.mxu0 0.0
        %1997 = vmatprep.subr.mxu0 0.0
        %1998 = vmatpush1.msra.mxu0 0.0
        %1999 = vmatprep.subr.mxu0 0.0
        %2000 = vmatpush1.msra.mxu0 0.0
        %2001 = vmatprep.subr.mxu0 0.0
        %2002 = vmatpush1.msra.mxu0 0.0
        %2003 = vmatprep.subr.mxu0 0.0
        %2004 = vmatpush1.msra.mxu0 0.0
        %2005 = vmatprep.subr.mxu0 0.0
        %2006 = vmatpush1.msra.mxu0 0.0
        %2007 = vmatprep.subr.mxu0 0.0
        %2008 = vmatpush1.msra.mxu0 0.0
        %2009 = vmatprep.subr.mxu0 0.0
        %2010 = vmatpush1.msra.mxu0 0.0
        %2011 = vmatprep.subr.mxu0 0.0
        %2012 = vmatpush1.msra.mxu0 0.0
        %2013 = vmatprep.subr.mxu0 0.0
        %2014 = vmatpush1.msra.mxu0 0.0
        %2015 = vmatprep.subr.mxu0 0.0
        %2016 = vmatpush1.msra.mxu0 0.0
        %2017 = vmatprep.mubr.f32.mxu0 0.0
        %v2018 = vand.u32 %v1697, 4294901760
        %v2019 = vsub.f32 %v1697, %v2018
        %v2020 = vand.u32 %v2019, 4294901760
        %2021 = vmatmul.mubr.f32.gmra.mrb[0].mxu0 %v2020
        %v2022 = vpop.f32.mrb[0].mxu0
        %v2023 = vadd.f32 %v1946, %v2022
        %v2024 = vpop.f32.mrb[0].mxu0
        %2025 = vdwg.mxu0
        %2026 = vmatprep.subr.mxu0 0.0
        %v2027 = vand.u32 %v220, 4294901760
        %v2028 = vsub.f32 %v220, %v2027
        %v2029 = vand.u32 %v2028, 4294901760
        %2030 = vmatpush1.msra.mxu0 %v2029
        %2031 = vmatprep.subr.mxu0 0.0
        %v2032 = vand.u32 %v221, 4294901760
        %v2033 = vsub.f32 %v221, %v2032
        %v2034 = vand.u32 %v2033, 4294901760
        %2035 = vmatpush1.msra.mxu0 %v2034
        %2036 = vmatprep.subr.mxu0 0.0
        %v2037 = vand.u32 %v222, 4294901760
        %v2038 = vsub.f32 %v222, %v2037
        %v2039 = vand.u32 %v2038, 4294901760
        %2040 = vmatpush1.msra.mxu0 %v2039
        %2041 = vmatprep.subr.mxu0 0.0
        %v2042 = vand.u32 %v223, 4294901760
        %v2043 = vsub.f32 %v223, %v2042
        %v2044 = vand.u32 %v2043, 4294901760
        %2045 = vmatpush1.msra.mxu0 %v2044
        %2046 = vmatprep.subr.mxu0 0.0
        %2047 = vmatpush1.msra.mxu0 0.0
        %2048 = vmatprep.subr.mxu0 0.0
        %2049 = vmatpush1.msra.mxu0 0.0
        %2050 = vmatprep.subr.mxu0 0.0
        %2051 = vmatpush1.msra.mxu0 0.0
        %2052 = vmatprep.subr.mxu0 0.0
        %2053 = vmatpush1.msra.mxu0 0.0
        %2054 = vmatprep.subr.mxu0 0.0
        %2055 = vmatpush1.msra.mxu0 0.0
        %2056 = vmatprep.subr.mxu0 0.0
        %2057 = vmatpush1.msra.mxu0 0.0
        %2058 = vmatprep.subr.mxu0 0.0
        %2059 = vmatpush1.msra.mxu0 0.0
        %2060 = vmatprep.subr.mxu0 0.0
        %2061 = vmatpush1.msra.mxu0 0.0
        %2062 = vmatprep.subr.mxu0 0.0
        %2063 = vmatpush1.msra.mxu0 0.0
        %2064 = vmatprep.subr.mxu0 0.0
        %2065 = vmatpush1.msra.mxu0 0.0
        %2066 = vmatprep.subr.mxu0 0.0
        %2067 = vmatpush1.msra.mxu0 0.0
        %2068 = vmatprep.subr.mxu0 0.0
        %2069 = vmatpush1.msra.mxu0 0.0
        %2070 = vmatprep.subr.mxu0 0.0
        %2071 = vmatpush1.msra.mxu0 0.0
        %2072 = vmatprep.subr.mxu0 0.0
        %2073 = vmatpush1.msra.mxu0 0.0
        %2074 = vmatprep.subr.mxu0 0.0
        %2075 = vmatpush1.msra.mxu0 0.0
        %2076 = vmatprep.subr.mxu0 0.0
        %2077 = vmatpush1.msra.mxu0 0.0
        %2078 = vmatprep.subr.mxu0 0.0
        %2079 = vmatpush1.msra.mxu0 0.0
        %2080 = vmatprep.subr.mxu0 0.0
        %2081 = vmatpush1.msra.mxu0 0.0
        %2082 = vmatprep.subr.mxu0 0.0
        %2083 = vmatpush1.msra.mxu0 0.0
        %2084 = vmatprep.subr.mxu0 0.0
        %2085 = vmatpush1.msra.mxu0 0.0
        %2086 = vmatprep.subr.mxu0 0.0
        %2087 = vmatpush1.msra.mxu0 0.0
        %2088 = vmatprep.subr.mxu0 0.0
        %2089 = vmatpush1.msra.mxu0 0.0
        %2090 = vmatprep.subr.mxu0 0.0
        %2091 = vmatpush1.msra.mxu0 0.0
        %2092 = vmatprep.subr.mxu0 0.0
        %2093 = vmatpush1.msra.mxu0 0.0
        %2094 = vmatprep.subr.mxu0 0.0
        %2095 = vmatpush1.msra.mxu0 0.0
        %2096 = vmatprep.subr.mxu0 0.0
        %2097 = vmatpush1.msra.mxu0 0.0
        %2098 = vmatprep.subr.mxu0 0.0
        %2099 = vmatpush1.msra.mxu0 0.0
        %2100 = vmatprep.subr.mxu0 0.0
        %2101 = vmatpush1.msra.mxu0 0.0
        %2102 = vmatprep.mubr.f32.mxu0 0.0
        %v2103 = vand.u32 %v1697, 4294901760
        %2104 = vmatmul.mubr.f32.gmra.mrb[0].mxu0 %v2103
        %v2105 = vpop.f32.mrb[0].mxu0
        %v2106 = vadd.f32 %v2023, %v2105
        %v2107 = vpop.f32.mrb[0].mxu0
        %2108 = vdwg.mxu0
        %2109 = vmatprep.subr.mxu0 0.0
        %v2110 = vand.u32 %v220, 4294901760
        %2111 = vmatpush1.msra.mxu0 %v2110
        %2112 = vmatprep.subr.mxu0 0.0
        %v2113 = vand.u32 %v221, 4294901760
        %2114 = vmatpush1.msra.mxu0 %v2113
        %2115 = vmatprep.subr.mxu0 0.0
        %v2116 = vand.u32 %v222, 4294901760
        %2117 = vmatpush1.msra.mxu0 %v2116
        %2118 = vmatprep.subr.mxu0 0.0
        %v2119 = vand.u32 %v223, 4294901760
        %2120 = vmatpush1.msra.mxu0 %v2119
        %2121 = vmatprep.subr.mxu0 0.0
        %2122 = vmatpush1.msra.mxu0 0.0
        %2123 = vmatprep.subr.mxu0 0.0
        %2124 = vmatpush1.msra.mxu0 0.0
        %2125 = vmatprep.subr.mxu0 0.0
        %2126 = vmatpush1.msra.mxu0 0.0
        %2127 = vmatprep.subr.mxu0 0.0
        %2128 = vmatpush1.msra.mxu0 0.0
        %2129 = vmatprep.subr.mxu0 0.0
        %2130 = vmatpush1.msra.mxu0 0.0
        %2131 = vmatprep.subr.mxu0 0.0
        %2132 = vmatpush1.msra.mxu0 0.0
        %2133 = vmatprep.subr.mxu0 0.0
        %2134 = vmatpush1.msra.mxu0 0.0
        %2135 = vmatprep.subr.mxu0 0.0
        %2136 = vmatpush1.msra.mxu0 0.0
        %2137 = vmatprep.subr.mxu0 0.0
        %2138 = vmatpush1.msra.mxu0 0.0
        %2139 = vmatprep.subr.mxu0 0.0
        %2140 = vmatpush1.msra.mxu0 0.0
        %2141 = vmatprep.subr.mxu0 0.0
        %2142 = vmatpush1.msra.mxu0 0.0
        %2143 = vmatprep.subr.mxu0 0.0
        %2144 = vmatpush1.msra.mxu0 0.0
        %2145 = vmatprep.subr.mxu0 0.0
        %2146 = vmatpush1.msra.mxu0 0.0
        %2147 = vmatprep.subr.mxu0 0.0
        %2148 = vmatpush1.msra.mxu0 0.0
        %2149 = vmatprep.subr.mxu0 0.0
        %2150 = vmatpush1.msra.mxu0 0.0
        %2151 = vmatprep.subr.mxu0 0.0
        %2152 = vmatpush1.msra.mxu0 0.0
        %2153 = vmatprep.subr.mxu0 0.0
        %2154 = vmatpush1.msra.mxu0 0.0
        %2155 = vmatprep.subr.mxu0 0.0
        %2156 = vmatpush1.msra.mxu0 0.0
        %2157 = vmatprep.subr.mxu0 0.0
        %2158 = vmatpush1.msra.mxu0 0.0
        %2159 = vmatprep.subr.mxu0 0.0
        %2160 = vmatpush1.msra.mxu0 0.0
        %2161 = vmatprep.subr.mxu0 0.0
        %2162 = vmatpush1.msra.mxu0 0.0
        %2163 = vmatprep.subr.mxu0 0.0
        %2164 = vmatpush1.msra.mxu0 0.0
        %2165 = vmatprep.subr.mxu0 0.0
        %2166 = vmatpush1.msra.mxu0 0.0
        %2167 = vmatprep.subr.mxu0 0.0
        %2168 = vmatpush1.msra.mxu0 0.0
        %2169 = vmatprep.subr.mxu0 0.0
        %2170 = vmatpush1.msra.mxu0 0.0
        %2171 = vmatprep.subr.mxu0 0.0
        %2172 = vmatpush1.msra.mxu0 0.0
        %2173 = vmatprep.subr.mxu0 0.0
        %2174 = vmatpush1.msra.mxu0 0.0
        %2175 = vmatprep.subr.mxu0 0.0
        %2176 = vmatpush1.msra.mxu0 0.0
        %2177 = vmatprep.mubr.f32.mxu0 0.0
        %v2178 = vand.u32 %v1697, 4294901760
        %2179 = vmatmul.mubr.f32.gmra.mrb[0].mxu0 %v2178
        %v2180 = vpop.f32.mrb[0].mxu0
        %v2181 = vadd.f32 %v2106, %v2180
        %v2182 = vpop.f32.mrb[0].mxu0
        %2183 = vdwg.mxu0
        %s2184 = sld [smem:[#allocation2]]
        %v2185 = vstv %s2184
        %v2186 = vmul.f32 %v711, %v2185
        %s2187 = sld [smem:[#allocation2 + $0x1]]
        %v2188 = vstv %s2187
        %v2189 = vmul.f32 %v1201, %v2188
        %v2190 = vadd.f32 %v2186, %v2189
        %s2191 = sld [smem:[#allocation2 + $0x2]]
        %v2192 = vstv %s2191
        %v2193 = vmul.f32 %v1691, %v2192
        %v2194 = vadd.f32 %v2190, %v2193
        %s2195 = sld [smem:[#allocation2 + $0x3]]
        %v2196 = vstv %s2195
        %v2197 = vmul.f32 %v2181, %v2196
        %v2198 = vadd.f32 %v2194, %v2197
        %vm2199 = vcmask 64512
        %2200 = vst.msk [vmem:[%s219] sm:$0xff] %vm2199, %v2198
        %s2201 = sld [smem:[#allocation2 + $0x80]]
        %v2202 = vstv %s2201
        %v2203 = vmul.f32 %v711, %v2202
        %s2204 = sld [smem:[#allocation2 + $0x81]]
        %v2205 = vstv %s2204
        %v2206 = vmul.f32 %v1201, %v2205
        %v2207 = vadd.f32 %v2203, %v2206
        %s2208 = sld [smem:[#allocation2 + $0x82]]
        %v2209 = vstv %s2208
        %v2210 = vmul.f32 %v1691, %v2209
        %v2211 = vadd.f32 %v2207, %v2210
        %s2212 = sld [smem:[#allocation2 + $0x83]]
        %v2213 = vstv %s2212
        %v2214 = vmul.f32 %v2181, %v2213
        %v2215 = vadd.f32 %v2211, %v2214
        %s2216 = scalar_lea.vmem %s219, 8 [#allocation7]
        %2217 = vst.msk [vmem:[%s2216] sm:$0xff] %vm2199, %v2215
        %s2218 = sld [smem:[#allocation2 + $0x100]]
        %v2219 = vstv %s2218
        %v2220 = vmul.f32 %v711, %v2219
        %s2221 = sld [smem:[#allocation2 + $0x101]]
        %v2222 = vstv %s2221
        %v2223 = vmul.f32 %v1201, %v2222
        %v2224 = vadd.f32 %v2220, %v2223
        %s2225 = sld [smem:[#allocation2 + $0x102]]
        %v2226 = vstv %s2225
        %v2227 = vmul.f32 %v1691, %v2226
        %v2228 = vadd.f32 %v2224, %v2227
        %s2229 = sld [smem:[#allocation2 + $0x103]]
        %v2230 = vstv %s2229
        %v2231 = vmul.f32 %v2181, %v2230
        %v2232 = vadd.f32 %v2228, %v2231
        %s2233 = scalar_lea.vmem %s219, 16 [#allocation7]
        %2234 = vst.msk [vmem:[%s2233] sm:$0xff] %vm2199, %v2232
        %s2235 = sld [smem:[#allocation2 + $0x180]]
        %v2236 = vstv %s2235
        %v2237 = vmul.f32 %v711, %v2236
        %s2238 = sld [smem:[#allocation2 + $0x181]]
        %v2239 = vstv %s2238
        %v2240 = vmul.f32 %v1201, %v2239
        %v2241 = vadd.f32 %v2237, %v2240
        %s2242 = sld [smem:[#allocation2 + $0x182]]
        %v2243 = vstv %s2242
        %v2244 = vmul.f32 %v1691, %v2243
        %v2245 = vadd.f32 %v2241, %v2244
        %s2246 = sld [smem:[#allocation2 + $0x183]]
        %v2247 = vstv %s2246
        %v2248 = vmul.f32 %v2181, %v2247
        %v2249 = vadd.f32 %v2245, %v2248
        %s2250 = scalar_lea.vmem %s219, 24 [#allocation7]
        %2251 = vst.msk [vmem:[%s2250] sm:$0xff] %vm2199, %v2249
        %s2252 = sld [smem:[#allocation2 + $0x200]]
        %v2253 = vstv %s2252
        %v2254 = vmul.f32 %v711, %v2253
        %s2255 = sld [smem:[#allocation2 + $0x201]]
        %v2256 = vstv %s2255
        %v2257 = vmul.f32 %v1201, %v2256
        %v2258 = vadd.f32 %v2254, %v2257
        %s2259 = sld [smem:[#allocation2 + $0x202]]
        %v2260 = vstv %s2259
        %v2261 = vmul.f32 %v1691, %v2260
        %v2262 = vadd.f32 %v2258, %v2261
        %s2263 = sld [smem:[#allocation2 + $0x203]]
        %v2264 = vstv %s2263
        %v2265 = vmul.f32 %v2181, %v2264
        %v2266 = vadd.f32 %v2262, %v2265
        %s2267 = scalar_lea.vmem %s219, 32 [#allocation7]
        %2268 = vst.msk [vmem:[%s2267] sm:$0xff] %vm2199, %v2266
        %s2269 = sld [smem:[#allocation2 + $0x280]]
        %v2270 = vstv %s2269
        %v2271 = vmul.f32 %v711, %v2270
        %s2272 = sld [smem:[#allocation2 + $0x281]]
        %v2273 = vstv %s2272
        %v2274 = vmul.f32 %v1201, %v2273
        %v2275 = vadd.f32 %v2271, %v2274
        %s2276 = sld [smem:[#allocation2 + $0x282]]
        %v2277 = vstv %s2276
        %v2278 = vmul.f32 %v1691, %v2277
        %v2279 = vadd.f32 %v2275, %v2278
        %s2280 = sld [smem:[#allocation2 + $0x283]]
        %v2281 = vstv %s2280
        %v2282 = vmul.f32 %v2181, %v2281
        %v2283 = vadd.f32 %v2279, %v2282
        %s2284 = scalar_lea.vmem %s219, 40 [#allocation7]
        %2285 = vst.msk [vmem:[%s2284] sm:$0xff] %vm2199, %v2283
        %s2286 = sld [smem:[#allocation2 + $0x300]]
        %v2287 = vstv %s2286
        %v2288 = vmul.f32 %v711, %v2287
        %s2289 = sld [smem:[#allocation2 + $0x301]]
        %v2290 = vstv %s2289
        %v2291 = vmul.f32 %v1201, %v2290
        %v2292 = vadd.f32 %v2288, %v2291
        %s2293 = sld [smem:[#allocation2 + $0x302]]
        %v2294 = vstv %s2293
        %v2295 = vmul.f32 %v1691, %v2294
        %v2296 = vadd.f32 %v2292, %v2295
        %s2297 = sld [smem:[#allocation2 + $0x303]]
        %v2298 = vstv %s2297
        %v2299 = vmul.f32 %v2181, %v2298
        %v2300 = vadd.f32 %v2296, %v2299
        %s2301 = scalar_lea.vmem %s219, 48 [#allocation7]
        %2302 = vst.msk [vmem:[%s2301] sm:$0xff] %vm2199, %v2300
        %s2303 = sld [smem:[#allocation2 + $0x380]]
        %v2304 = vstv %s2303
        %v2305 = vmul.f32 %v711, %v2304
        %s2306 = sld [smem:[#allocation2 + $0x381]]
        %v2307 = vstv %s2306
        %v2308 = vmul.f32 %v1201, %v2307
        %v2309 = vadd.f32 %v2305, %v2308
        %s2310 = sld [smem:[#allocation2 + $0x382]]
        %v2311 = vstv %s2310
        %v2312 = vmul.f32 %v1691, %v2311
        %v2313 = vadd.f32 %v2309, %v2312
        %s2314 = sld [smem:[#allocation2 + $0x383]]
        %v2315 = vstv %s2314
        %v2316 = vmul.f32 %v2181, %v2315
        %v2317 = vadd.f32 %v2313, %v2316
        %s2318 = scalar_lea.vmem %s219, 56 [#allocation7]
        %2319 = vst.msk [vmem:[%s2318] sm:$0xff] %vm2199, %v2317
        %s2320 = sand.u32 %s113, 1
        %s2321 = scalar_lea.sflag [#allocation4], %s2320
        %s2322 = sand.u32 %s113, 1
        %s2323 = smul.addr %s2322, 64
        %s2324 = scalar_lea.vmem [#allocation7], %s2323
        // Predicated region
        $region41: #{tpu_custom_call.1} parent=31 // pred_check
          %p2325 = pneg %p123
        $region42: #{tpu_custom_call.1} parent=31 // pred_check_branch
          %2327 = sbr.rel (%p2325) target = $region44
        $region43: #{tpu_custom_call.1} parent=31 // pred_region
          %s2329 = ssub.s32 1024, 1024
          %2330 = vsyncadd %s2321, %s2329
          %s2331 = smul.addr %s25, 8
          %s2332 = sadd.s32 %s26, %s2331
          %s2333 = smul.addr %s2332, 128
          %s2334 = scalar_lea.hbm %s3, %s2333
          %s2335 = sshll.u32 %s2324, 4
          %s2336 = int_to_ptr.vmem [resolvable:$true] %s2335
          %2341 = dma.vmem_to_hbm [thread:$0]  %s2336, 1024, %s2334, %s2321, 128, 128, 8
        $region44: #{tpu_custom_call.1} parent=31 // pred_fallthru
          _
      $region32: #{tpu_custom_call.1} parent=5 // pred_fallthru
        _
      %p2342 = scmp.le.s32.totalorder 2, %s16
      // Predicated region
      $region45: #{tpu_custom_call.1} parent=5 // pred_check
        %p2343 = pneg %p2342
      $region46: #{tpu_custom_call.1} parent=5 // pred_check_branch
        %2345 = sbr.rel (%p2343) target = $region48
      $region47: #{tpu_custom_call.1} parent=5 // pred_region
        %s2346 = ssub.s32 %s16, 2
        // Predicated region
        $region49: #{tpu_custom_call.1} parent=47 // pred_check
          %p2347 = pneg %p129
        $region50: #{tpu_custom_call.1} parent=47 // pred_check_branch
          %2349 = sbr.rel (%p2347) target = $region52
        $region51: #{tpu_custom_call.1} parent=47 // pred_region
          %s2350 = sand.u32 %s114, 1
          %s2351 = scalar_lea.sflag [#allocation4], %s2350
          %s2352 = sand.u32 %s114, 1
          %s2353 = smul.addr %s2352, 64
          %s2354 = scalar_lea.vmem [#allocation7], %s2353
          %2355 = dma.done %s2351, 1024
        $region52: #{tpu_custom_call.1} parent=47 // pred_fallthru
          _
      $region48: #{tpu_custom_call.1} parent=5 // pred_fallthru
        _
    $region6: #{tpu_custom_call.1} parent=1 // loop_footer
      %s20 = sadd.s32 1, %s16
    $region7: #{tpu_custom_call.1} parent=1 // loop_footer_branch
      %15 = sbr.rel target = $region3
    $region8: #{tpu_custom_call.1} parent=1 // loop_exit
      _
    %2356 = vsyncpa [#allocation3], 1
    %s2357 = scalar_lea.sflag [#allocation3], 1
    %2358 = vsyncpa %s2357, 1
    %2359 = vsyncpa [#allocation4], 1
    %s2360 = scalar_lea.sflag [#allocation4], 1
    %2361 = vsyncpa %s2360, 1
    %2362 = vsyncpa [#allocation5], 1
    %s2363 = scalar_lea.sflag [#allocation5], 1
    %2364 = vsyncpa %s2363, 1

</llo_original>
